<compile_context>
chip_gen: v6e
topology: v6e:2x2x1
jax: 0.10.0
libtpu: 0.0.40
codegen_flags: <defaults>
</compile_context>

<pallas_src>
import functools
import math

import jax
import jax.numpy as jnp
from jax.experimental import pallas as pl
from jax.experimental.pallas import tpu as pltpu


def _layernorm(y, gamma, beta, eps):
    mu = jnp.mean(y, axis=-1, keepdims=True)
    var = jnp.mean((y - mu) ** 2, axis=-1, keepdims=True)
    return (y - mu) * jax.lax.rsqrt(var + eps) * gamma + beta


# ----------------------------------------------------------------------------
# Single fused kernel: conv stack + MHA(+res+LN) + FFN(+res+LN).
# ----------------------------------------------------------------------------
def _encoder_kernel(x_ref,
                    convw_ref, convb_ref,
                    wqkv_ref, bqkv_ref, wo_ref, bo_ref,
                    ln1g_ref, ln1b_ref,
                    w1_ref, b1_ref, w2_ref, b2_ref,
                    ln2g_ref, ln2b_ref,
                    o_ref,
                    *, conv_layers, K, num_heads, eps):
    B, T, H = x_ref.shape
    BT = B * T
    pad = (K - 1) // 2
    dH = H // num_heads

    x = x_ref[...].astype(jnp.float32)                        # (B, T, H), VMEM-resident

    # ---------------- ConvEncoder: im2col -> one bf16 matmul per layer -------
    zpad = jnp.zeros((B, pad, H), jnp.float32)
    for layer in range(conv_layers):                          # static unroll over layers
        xp = jnp.concatenate([zpad, x, zpad], axis=1)         # (B, T+K-1, H), zero halo in VMEM
        cols = [xp[:, k:k + T, :] for k in range(K)]          # K time-shifted views
        im2col = jnp.concatenate(cols, axis=-1)               # (B, T, K*H)
        a = im2col.reshape(BT, K * H).astype(jnp.bfloat16)
        w = convw_ref[layer].astype(jnp.bfloat16)             # (K*H, H)
        y = jnp.dot(a, w, preferred_element_type=jnp.float32) + convb_ref[layer]
        x = jnp.maximum(y, 0.0).reshape(B, T, H)              # ReLU

    # ---------------- Multi-head self-attention + residual + LayerNorm -------
    x2 = x.reshape(BT, H)                                     # residual (f32)
    xb = x2.astype(jnp.bfloat16)

    # Fused QKV projection: one (BT, H) x (H, 3H) matmul.
    qkv = jnp.dot(xb, wqkv_ref[...].astype(jnp.bfloat16),
                  preferred_element_type=jnp.float32) + bqkv_ref[...]
    scale = 1.0 / math.sqrt(dH)
    q = qkv[:, 0 * H:1 * H] * scale                           # fold softmax scale into Q
    k = qkv[:, 1 * H:2 * H]
    v = qkv[:, 2 * H:3 * H]
    q3 = q.reshape(B, T, H).astype(jnp.bfloat16)
    k3 = k.reshape(B, T, H).astype(jnp.bfloat16)
    v3 = v.reshape(B, T, H).astype(jnp.bfloat16)

    parts = []
    for h in range(num_heads):                                # static unroll; each iter batched over B
        sl = slice(h * dH, (h + 1) * dH)
        qh, kh, vh = q3[:, :, sl], k3[:, :, sl], v3[:, :, sl]  # (B, T, dH)
        s = jnp.einsum('bqd,bkd->bqk', qh, kh,
                       preferred_element_type=jnp.float32)
        s = s - jnp.max(s, axis=-1, keepdims=True)
        p = jnp.exp(s)
        p = p * pl.reciprocal(jnp.sum(p, axis=-1, keepdims=True), approx=True)
        parts.append(jnp.einsum('bqk,bkd->bqd', p.astype(jnp.bfloat16), vh,
                                preferred_element_type=jnp.float32))
    ctx = jnp.concatenate(parts, axis=-1).reshape(BT, H)      # (B*T, H)

    attn = jnp.dot(ctx.astype(jnp.bfloat16), wo_ref[...].astype(jnp.bfloat16),
                   preferred_element_type=jnp.float32) + bo_ref[...]
    a1 = _layernorm(attn + x2, ln1g_ref[...], ln1b_ref[...], eps)

    # ---------------- Position-wise feed-forward + residual + LayerNorm ------
    h1 = jnp.dot(a1.astype(jnp.bfloat16), w1_ref[...].astype(jnp.bfloat16),
                 preferred_element_type=jnp.float32) + b1_ref[...]
    h1 = jnp.maximum(h1, 0.0)
    h2 = jnp.dot(h1.astype(jnp.bfloat16), w2_ref[...].astype(jnp.bfloat16),
                 preferred_element_type=jnp.float32) + b2_ref[...]
    out = _layernorm(h2 + a1, ln2g_ref[...], ln2b_ref[...], eps)

    o_ref[...] = out.reshape(B, T, H).astype(o_ref.dtype)


def encoder_forward(params, x):
    """x: (B, T, H) float32 -> (B, T, H) float32.  One fused pallas_call."""
    B, T, H = x.shape
    K = params["kernel_size"]
    nh = params["num_heads"]
    L = params["conv_layers"]
    assert K % 2 == 1, "same-padding conv assumes odd kernel_size"
    assert H % nh == 0, "num_heads must divide hidden_dim"
    assert T % 8 == 0, "T must be a multiple of 8 for the (B,T,H)->(B*T,H) reshape"

    kernel = functools.partial(_encoder_kernel, conv_layers=L, K=K,
                               num_heads=nh, eps=1e-5)
    a, f = params["attn"], params["ffn"]
    vmem = pl.BlockSpec(memory_space=pltpu.MemorySpace.VMEM)
    return pl.pallas_call(
        kernel,
        out_shape=jax.ShapeDtypeStruct((B, T, H), x.dtype),
        in_specs=[vmem] * 15,
        out_specs=vmem,
        compiler_params=pltpu.CompilerParams(vmem_limit_bytes=96 * 1024 * 1024),
    )(x, params["conv_w"], params["conv_b"],
      a["wqkv"], a["bqkv"], a["wo"], a["bo"], a["ln_g"], a["ln_b"],
      f["w1"], f["b1"], f["w2"], f["b2"], f["ln_g"], f["ln_b"])


# ----------------------------------------------------------------------------
# Parameter construction (plain JAX glue).
# ----------------------------------------------------------------------------
def init_encoder_params(key, *, conv_layers, hidden_dim, feed_forward_dim,
                        kernel_size=5, num_heads=4):
    H = hidden_dim
    keys = jax.random.split(key, conv_layers + 6)
    scale = 0.05
    # Conv weights stored stacked & pre-flattened for the im2col matmul:
    #   w[k, c, o] (tap, in-channel, out-channel) -> (K*H_in, H_out), row = k*H + c.
    conv_w = [scale * jax.random.normal(keys[i], (kernel_size, H, H), jnp.float32)
              .reshape(kernel_size * H, H) for i in range(conv_layers)]
    params = {
        "conv_layers": conv_layers,
        "kernel_size": kernel_size,
        "num_heads": num_heads,
        "conv_w": jnp.stack(conv_w),                          # (L, K*H, H)
        "conv_b": jnp.zeros((conv_layers, 1, H), jnp.float32),
    }
    kq, kk, kv, ko, k1, k2 = keys[conv_layers:conv_layers + 6]
    wq = scale * jax.random.normal(kq, (H, H), jnp.float32)
    wk = scale * jax.random.normal(kk, (H, H), jnp.float32)
    wv = scale * jax.random.normal(kv, (H, H), jnp.float32)
    params["attn"] = {
        # Q/K/V projection weights stored fused along the output dim: (H, 3H).
        "wqkv": jnp.concatenate([wq, wk, wv], axis=1),
        "bqkv": jnp.zeros((1, 3 * H), jnp.float32),
        "wo": scale * jax.random.normal(ko, (H, H), jnp.float32),
        "bo": jnp.zeros((1, H), jnp.float32),
        "ln_g": jnp.ones((1, H), jnp.float32),
        "ln_b": jnp.zeros((1, H), jnp.float32),
    }
    params["ffn"] = {
        "w1": scale * jax.random.normal(k1, (H, feed_forward_dim), jnp.float32),
        "b1": jnp.zeros((1, feed_forward_dim), jnp.float32),
        "w2": scale * jax.random.normal(k2, (feed_forward_dim, H), jnp.float32),
        "b2": jnp.zeros((1, H), jnp.float32),
        "ln_g": jnp.ones((1, H), jnp.float32),
        "ln_b": jnp.zeros((1, H), jnp.float32),
    }
    return params


if __name__ == "__main__":
    # Small shapes consistent with the module: batch=2, seq=16, hidden=32,
    # 3 conv layers, feed_forward_dim=64 (module default 2048 kept small).
    B, T, H = 2, 16, 32
    CONV_LAYERS = 3
    FFN_DIM = 64

    key = jax.random.PRNGKey(0)
    k_x, k_p = jax.random.split(key)
    x = jax.random.normal(k_x, (B, T, H), dtype=jnp.float32)

    params = init_encoder_params(k_p, conv_layers=CONV_LAYERS, hidden_dim=H,
                                 feed_forward_dim=FFN_DIM)

    out = encoder_forward(params, x)
    out = jax.block_until_ready(out)
    assert out.shape == (B, T, H) and out.dtype == jnp.float32
    assert bool(jnp.all(jnp.isfinite(out)))
    print("KERNEL_OK")
</pallas_src>

<mosaic_0001>
module attributes {stable_mosaic.version = 11 : i64} {
  func.func @_encoder_kernel(%arg0: memref<2x16x32xf32, #tpu.memory_space<vmem>>, %arg1: memref<3x160x32xf32, #tpu.memory_space<vmem>>, %arg2: memref<3x1x32xf32, #tpu.memory_space<vmem>>, %arg3: memref<32x96xf32, #tpu.memory_space<vmem>>, %arg4: memref<1x96xf32, #tpu.memory_space<vmem>>, %arg5: memref<32x32xf32, #tpu.memory_space<vmem>>, %arg6: memref<1x32xf32, #tpu.memory_space<vmem>>, %arg7: memref<1x32xf32, #tpu.memory_space<vmem>>, %arg8: memref<1x32xf32, #tpu.memory_space<vmem>>, %arg9: memref<32x64xf32, #tpu.memory_space<vmem>>, %arg10: memref<1x64xf32, #tpu.memory_space<vmem>>, %arg11: memref<64x32xf32, #tpu.memory_space<vmem>>, %arg12: memref<1x32xf32, #tpu.memory_space<vmem>>, %arg13: memref<1x32xf32, #tpu.memory_space<vmem>>, %arg14: memref<1x32xf32, #tpu.memory_space<vmem>>, %arg15: memref<2x16x32xf32, #tpu.memory_space<vmem>>) attributes {dimension_semantics = [], scalar_prefetch = 0 : i64, scratch_operands = 0 : i64, tpu.core_type = #tpu.core_type<tc>} {
    %c0 = arith.constant 0 : index
    %c0_0 = arith.constant 0 : index
    %c0_1 = arith.constant 0 : index
    %0 = vector.load %arg0[%c0, %c0_0, %c0_1] : memref<2x16x32xf32, #tpu.memory_space<vmem>>, vector<2x16x32xf32>
    %cst = arith.constant 0.000000e+00 : f32
    %1 = vector.broadcast %cst : f32 to vector<2x2x32xf32>
    %2 = tpu.concatenate %1, %0, %1 in 1 : vector<2x2x32xf32>, vector<2x16x32xf32>, vector<2x2x32xf32> -> vector<2x20x32xf32>
    %3 = vector.extract_strided_slice %2 {offsets = [0, 0, 0], sizes = [2, 16, 32], strides = [1, 1, 1]} : vector<2x20x32xf32> to vector<2x16x32xf32>
    %4 = vector.extract_strided_slice %2 {offsets = [0, 1, 0], sizes = [2, 16, 32], strides = [1, 1, 1]} : vector<2x20x32xf32> to vector<2x16x32xf32>
    %5 = vector.extract_strided_slice %2 {offsets = [0, 2, 0], sizes = [2, 16, 32], strides = [1, 1, 1]} : vector<2x20x32xf32> to vector<2x16x32xf32>
    %6 = vector.extract_strided_slice %2 {offsets = [0, 3, 0], sizes = [2, 16, 32], strides = [1, 1, 1]} : vector<2x20x32xf32> to vector<2x16x32xf32>
    %7 = vector.extract_strided_slice %2 {offsets = [0, 4, 0], sizes = [2, 16, 32], strides = [1, 1, 1]} : vector<2x20x32xf32> to vector<2x16x32xf32>
    %8 = tpu.concatenate %3, %4, %5, %6, %7 in 2 : vector<2x16x32xf32>, vector<2x16x32xf32>, vector<2x16x32xf32>, vector<2x16x32xf32>, vector<2x16x32xf32> -> vector<2x16x160xf32>
    %9 = vector.shape_cast %8 : vector<2x16x160xf32> to vector<32x160xf32>
    %10 = arith.truncf %9 : vector<32x160xf32> to vector<32x160xbf16>
    %c0_2 = arith.constant 0 : index
    %c0_3 = arith.constant 0 : index
    %c0_4 = arith.constant 0 : index
    %11 = vector.load %arg1[%c0_2, %c0_3, %c0_4] : memref<3x160x32xf32, #tpu.memory_space<vmem>>, vector<1x160x32xf32>
    %12 = vector.shape_cast %11 : vector<1x160x32xf32> to vector<160x32xf32>
    %13 = arith.truncf %12 : vector<160x32xf32> to vector<160x32xbf16>
    %cst_5 = arith.constant dense<0.000000e+00> : vector<32x32xf32>
    %14 = tpu.matmul %10, %13, %cst_5 {dimension_numbers = #tpu.dot_dimension_numbers<[1], [0], [0], [1], [0, 0, 1, 1], [], []>} : vector<32x160xbf16>, vector<160x32xbf16>, vector<32x32xf32> -> vector<32x32xf32>
    %c0_6 = arith.constant 0 : index
    %c0_7 = arith.constant 0 : index
    %c0_8 = arith.constant 0 : index
    %15 = vector.load %arg2[%c0_6, %c0_7, %c0_8] : memref<3x1x32xf32, #tpu.memory_space<vmem>>, vector<1x1x32xf32>
    %16 = vector.shape_cast %15 : vector<1x1x32xf32> to vector<1x32xf32>
    %17 = vector.broadcast %16 : vector<1x32xf32> to vector<32x32xf32>
    %18 = arith.addf %14, %17 : vector<32x32xf32>
    %cst_9 = arith.constant 0.000000e+00 : f32
    %19 = vector.broadcast %cst_9 : f32 to vector<32x32xf32>
    %20 = arith.maximumf %18, %19 : vector<32x32xf32>
    %21 = vector.shape_cast %20 : vector<32x32xf32> to vector<2x16x32xf32>
    %22 = tpu.concatenate %1, %21, %1 in 1 : vector<2x2x32xf32>, vector<2x16x32xf32>, vector<2x2x32xf32> -> vector<2x20x32xf32>
    %23 = vector.extract_strided_slice %22 {offsets = [0, 0, 0], sizes = [2, 16, 32], strides = [1, 1, 1]} : vector<2x20x32xf32> to vector<2x16x32xf32>
    %24 = vector.extract_strided_slice %22 {offsets = [0, 1, 0], sizes = [2, 16, 32], strides = [1, 1, 1]} : vector<2x20x32xf32> to vector<2x16x32xf32>
    %25 = vector.extract_strided_slice %22 {offsets = [0, 2, 0], sizes = [2, 16, 32], strides = [1, 1, 1]} : vector<2x20x32xf32> to vector<2x16x32xf32>
    %26 = vector.extract_strided_slice %22 {offsets = [0, 3, 0], sizes = [2, 16, 32], strides = [1, 1, 1]} : vector<2x20x32xf32> to vector<2x16x32xf32>
    %27 = vector.extract_strided_slice %22 {offsets = [0, 4, 0], sizes = [2, 16, 32], strides = [1, 1, 1]} : vector<2x20x32xf32> to vector<2x16x32xf32>
    %28 = tpu.concatenate %23, %24, %25, %26, %27 in 2 : vector<2x16x32xf32>, vector<2x16x32xf32>, vector<2x16x32xf32>, vector<2x16x32xf32>, vector<2x16x32xf32> -> vector<2x16x160xf32>
    %29 = vector.shape_cast %28 : vector<2x16x160xf32> to vector<32x160xf32>
    %30 = arith.truncf %29 : vector<32x160xf32> to vector<32x160xbf16>
    %c1 = arith.constant 1 : index
    %c0_10 = arith.constant 0 : index
    %c0_11 = arith.constant 0 : index
    %31 = vector.load %arg1[%c1, %c0_10, %c0_11] : memref<3x160x32xf32, #tpu.memory_space<vmem>>, vector<1x160x32xf32>
    %32 = vector.shape_cast %31 : vector<1x160x32xf32> to vector<160x32xf32>
    %33 = arith.truncf %32 : vector<160x32xf32> to vector<160x32xbf16>
    %cst_12 = arith.constant dense<0.000000e+00> : vector<32x32xf32>
    %34 = tpu.matmul %30, %33, %cst_12 {dimension_numbers = #tpu.dot_dimension_numbers<[1], [0], [0], [1], [0, 0, 1, 1], [], []>} : vector<32x160xbf16>, vector<160x32xbf16>, vector<32x32xf32> -> vector<32x32xf32>
    %c1_13 = arith.constant 1 : index
    %c0_14 = arith.constant 0 : index
    %c0_15 = arith.constant 0 : index
    %35 = vector.load %arg2[%c1_13, %c0_14, %c0_15] : memref<3x1x32xf32, #tpu.memory_space<vmem>>, vector<1x1x32xf32>
    %36 = vector.shape_cast %35 : vector<1x1x32xf32> to vector<1x32xf32>
    %37 = vector.broadcast %36 : vector<1x32xf32> to vector<32x32xf32>
    %38 = arith.addf %34, %37 : vector<32x32xf32>
    %cst_16 = arith.constant 0.000000e+00 : f32
    %39 = vector.broadcast %cst_16 : f32 to vector<32x32xf32>
    %40 = arith.maximumf %38, %39 : vector<32x32xf32>
    %41 = vector.shape_cast %40 : vector<32x32xf32> to vector<2x16x32xf32>
    %42 = tpu.concatenate %1, %41, %1 in 1 : vector<2x2x32xf32>, vector<2x16x32xf32>, vector<2x2x32xf32> -> vector<2x20x32xf32>
    %43 = vector.extract_strided_slice %42 {offsets = [0, 0, 0], sizes = [2, 16, 32], strides = [1, 1, 1]} : vector<2x20x32xf32> to vector<2x16x32xf32>
    %44 = vector.extract_strided_slice %42 {offsets = [0, 1, 0], sizes = [2, 16, 32], strides = [1, 1, 1]} : vector<2x20x32xf32> to vector<2x16x32xf32>
    %45 = vector.extract_strided_slice %42 {offsets = [0, 2, 0], sizes = [2, 16, 32], strides = [1, 1, 1]} : vector<2x20x32xf32> to vector<2x16x32xf32>
    %46 = vector.extract_strided_slice %42 {offsets = [0, 3, 0], sizes = [2, 16, 32], strides = [1, 1, 1]} : vector<2x20x32xf32> to vector<2x16x32xf32>
    %47 = vector.extract_strided_slice %42 {offsets = [0, 4, 0], sizes = [2, 16, 32], strides = [1, 1, 1]} : vector<2x20x32xf32> to vector<2x16x32xf32>
    %48 = tpu.concatenate %43, %44, %45, %46, %47 in 2 : vector<2x16x32xf32>, vector<2x16x32xf32>, vector<2x16x32xf32>, vector<2x16x32xf32>, vector<2x16x32xf32> -> vector<2x16x160xf32>
    %49 = vector.shape_cast %48 : vector<2x16x160xf32> to vector<32x160xf32>
    %50 = arith.truncf %49 : vector<32x160xf32> to vector<32x160xbf16>
    %c2 = arith.constant 2 : index
    %c0_17 = arith.constant 0 : index
    %c0_18 = arith.constant 0 : index
    %51 = vector.load %arg1[%c2, %c0_17, %c0_18] : memref<3x160x32xf32, #tpu.memory_space<vmem>>, vector<1x160x32xf32>
    %52 = vector.shape_cast %51 : vector<1x160x32xf32> to vector<160x32xf32>
    %53 = arith.truncf %52 : vector<160x32xf32> to vector<160x32xbf16>
    %cst_19 = arith.constant dense<0.000000e+00> : vector<32x32xf32>
    %54 = tpu.matmul %50, %53, %cst_19 {dimension_numbers = #tpu.dot_dimension_numbers<[1], [0], [0], [1], [0, 0, 1, 1], [], []>} : vector<32x160xbf16>, vector<160x32xbf16>, vector<32x32xf32> -> vector<32x32xf32>
    %c2_20 = arith.constant 2 : index
    %c0_21 = arith.constant 0 : index
    %c0_22 = arith.constant 0 : index
    %55 = vector.load %arg2[%c2_20, %c0_21, %c0_22] : memref<3x1x32xf32, #tpu.memory_space<vmem>>, vector<1x1x32xf32>
    %56 = vector.shape_cast %55 : vector<1x1x32xf32> to vector<1x32xf32>
    %57 = vector.broadcast %56 : vector<1x32xf32> to vector<32x32xf32>
    %58 = arith.addf %54, %57 : vector<32x32xf32>
    %cst_23 = arith.constant 0.000000e+00 : f32
    %59 = vector.broadcast %cst_23 : f32 to vector<32x32xf32>
    %60 = arith.maximumf %58, %59 : vector<32x32xf32>
    %61 = vector.shape_cast %60 : vector<32x32xf32> to vector<2x16x32xf32>
    %62 = vector.shape_cast %61 : vector<2x16x32xf32> to vector<32x32xf32>
    %63 = arith.truncf %62 : vector<32x32xf32> to vector<32x32xbf16>
    %c0_24 = arith.constant 0 : index
    %c0_25 = arith.constant 0 : index
    %64 = vector.load %arg3[%c0_24, %c0_25] : memref<32x96xf32, #tpu.memory_space<vmem>>, vector<32x96xf32>
    %65 = arith.truncf %64 : vector<32x96xf32> to vector<32x96xbf16>
    %cst_26 = arith.constant dense<0.000000e+00> : vector<32x96xf32>
    %66 = tpu.matmul %63, %65, %cst_26 {dimension_numbers = #tpu.dot_dimension_numbers<[1], [0], [0], [1], [0, 0, 1, 1], [], []>} : vector<32x32xbf16>, vector<32x96xbf16>, vector<32x96xf32> -> vector<32x96xf32>
    %c0_27 = arith.constant 0 : index
    %c0_28 = arith.constant 0 : index
    %67 = vector.load %arg4[%c0_27, %c0_28] : memref<1x96xf32, #tpu.memory_space<vmem>>, vector<1x96xf32>
    %68 = vector.broadcast %67 : vector<1x96xf32> to vector<32x96xf32>
    %69 = arith.addf %66, %68 : vector<32x96xf32>
    %70 = vector.extract_strided_slice %69 {offsets = [0, 0], sizes = [32, 32], strides = [1, 1]} : vector<32x96xf32> to vector<32x32xf32>
    %cst_29 = arith.constant 0.353553385 : f32
    %71 = vector.broadcast %cst_29 : f32 to vector<32x32xf32>
    %72 = arith.mulf %70, %71 : vector<32x32xf32>
    %73 = vector.extract_strided_slice %69 {offsets = [0, 32], sizes = [32, 32], strides = [1, 1]} : vector<32x96xf32> to vector<32x32xf32>
    %74 = vector.extract_strided_slice %69 {offsets = [0, 64], sizes = [32, 32], strides = [1, 1]} : vector<32x96xf32> to vector<32x32xf32>
    %75 = vector.shape_cast %72 : vector<32x32xf32> to vector<2x16x32xf32>
    %76 = arith.truncf %75 : vector<2x16x32xf32> to vector<2x16x32xbf16>
    %77 = vector.shape_cast %73 : vector<32x32xf32> to vector<2x16x32xf32>
    %78 = arith.truncf %77 : vector<2x16x32xf32> to vector<2x16x32xbf16>
    %79 = vector.shape_cast %74 : vector<32x32xf32> to vector<2x16x32xf32>
    %80 = arith.truncf %79 : vector<2x16x32xf32> to vector<2x16x32xbf16>
    %81 = vector.extract_strided_slice %76 {offsets = [0, 0, 0], sizes = [2, 16, 8], strides = [1, 1, 1]} : vector<2x16x32xbf16> to vector<2x16x8xbf16>
    %82 = vector.extract_strided_slice %78 {offsets = [0, 0, 0], sizes = [2, 16, 8], strides = [1, 1, 1]} : vector<2x16x32xbf16> to vector<2x16x8xbf16>
    %83 = vector.extract_strided_slice %80 {offsets = [0, 0, 0], sizes = [2, 16, 8], strides = [1, 1, 1]} : vector<2x16x32xbf16> to vector<2x16x8xbf16>
    "tpu.trace_start"() <{level = 10 : i32, message = "bqd,bkd->bqk"}> : () -> ()
    %cst_30 = arith.constant dense<0.000000e+00> : vector<2x16x16xf32>
    %84 = tpu.matmul %81, %82, %cst_30 {dimension_numbers = #tpu.dot_dimension_numbers<[2], [2], [1], [1], [0, 0, 0, 1, 1, 1], [0], [0]>} : vector<2x16x8xbf16>, vector<2x16x8xbf16>, vector<2x16x16xf32> -> vector<2x16x16xf32>
    "tpu.trace_stop"() : () -> ()
    %cst_31 = arith.constant dense<0xFF800000> : vector<2x16xf32>
    %85 = vector.multi_reduction <maximumf>, %84, %cst_31 [2] : vector<2x16x16xf32> to vector<2x16xf32>
    %86 = vector.shape_cast %85 : vector<2x16xf32> to vector<2x16x1xf32>
    %87 = vector.broadcast %86 : vector<2x16x1xf32> to vector<2x16x16xf32>
    %88 = arith.subf %84, %87 : vector<2x16x16xf32>
    %89 = math.exp %88 : vector<2x16x16xf32>
    %cst_32 = arith.constant dense<0.000000e+00> : vector<2x16xf32>
    %90 = vector.multi_reduction <add>, %89, %cst_32 [2] : vector<2x16x16xf32> to vector<2x16xf32>
    %91 = vector.shape_cast %90 : vector<2x16xf32> to vector<2x16x1xf32>
    %92 = tpu.reciprocal %91 {approx = true} : vector<2x16x1xf32> -> vector<2x16x1xf32>
    %93 = vector.broadcast %92 : vector<2x16x1xf32> to vector<2x16x16xf32>
    %94 = arith.mulf %89, %93 : vector<2x16x16xf32>
    %95 = arith.truncf %94 : vector<2x16x16xf32> to vector<2x16x16xbf16>
    "tpu.trace_start"() <{level = 10 : i32, message = "bqk,bkd->bqd"}> : () -> ()
    %cst_33 = arith.constant dense<0.000000e+00> : vector<2x16x8xf32>
    %96 = tpu.matmul %95, %83, %cst_33 {dimension_numbers = #tpu.dot_dimension_numbers<[2], [1], [1], [2], [0, 0, 0, 1, 1, 2], [0], [0]>} : vector<2x16x16xbf16>, vector<2x16x8xbf16>, vector<2x16x8xf32> -> vector<2x16x8xf32>
    "tpu.trace_stop"() : () -> ()
    %97 = vector.extract_strided_slice %76 {offsets = [0, 0, 8], sizes = [2, 16, 8], strides = [1, 1, 1]} : vector<2x16x32xbf16> to vector<2x16x8xbf16>
    %98 = vector.extract_strided_slice %78 {offsets = [0, 0, 8], sizes = [2, 16, 8], strides = [1, 1, 1]} : vector<2x16x32xbf16> to vector<2x16x8xbf16>
    %99 = vector.extract_strided_slice %80 {offsets = [0, 0, 8], sizes = [2, 16, 8], strides = [1, 1, 1]} : vector<2x16x32xbf16> to vector<2x16x8xbf16>
    "tpu.trace_start"() <{level = 10 : i32, message = "bqd,bkd->bqk"}> : () -> ()
    %cst_34 = arith.constant dense<0.000000e+00> : vector<2x16x16xf32>
    %100 = tpu.matmul %97, %98, %cst_34 {dimension_numbers = #tpu.dot_dimension_numbers<[2], [2], [1], [1], [0, 0, 0, 1, 1, 1], [0], [0]>} : vector<2x16x8xbf16>, vector<2x16x8xbf16>, vector<2x16x16xf32> -> vector<2x16x16xf32>
    "tpu.trace_stop"() : () -> ()
    %cst_35 = arith.constant dense<0xFF800000> : vector<2x16xf32>
    %101 = vector.multi_reduction <maximumf>, %100, %cst_35 [2] : vector<2x16x16xf32> to vector<2x16xf32>
    %102 = vector.shape_cast %101 : vector<2x16xf32> to vector<2x16x1xf32>
    %103 = vector.broadcast %102 : vector<2x16x1xf32> to vector<2x16x16xf32>
    %104 = arith.subf %100, %103 : vector<2x16x16xf32>
    %105 = math.exp %104 : vector<2x16x16xf32>
    %cst_36 = arith.constant dense<0.000000e+00> : vector<2x16xf32>
    %106 = vector.multi_reduction <add>, %105, %cst_36 [2] : vector<2x16x16xf32> to vector<2x16xf32>
    %107 = vector.shape_cast %106 : vector<2x16xf32> to vector<2x16x1xf32>
    %108 = tpu.reciprocal %107 {approx = true} : vector<2x16x1xf32> -> vector<2x16x1xf32>
    %109 = vector.broadcast %108 : vector<2x16x1xf32> to vector<2x16x16xf32>
    %110 = arith.mulf %105, %109 : vector<2x16x16xf32>
    %111 = arith.truncf %110 : vector<2x16x16xf32> to vector<2x16x16xbf16>
    "tpu.trace_start"() <{level = 10 : i32, message = "bqk,bkd->bqd"}> : () -> ()
    %cst_37 = arith.constant dense<0.000000e+00> : vector<2x16x8xf32>
    %112 = tpu.matmul %111, %99, %cst_37 {dimension_numbers = #tpu.dot_dimension_numbers<[2], [1], [1], [2], [0, 0, 0, 1, 1, 2], [0], [0]>} : vector<2x16x16xbf16>, vector<2x16x8xbf16>, vector<2x16x8xf32> -> vector<2x16x8xf32>
    "tpu.trace_stop"() : () -> ()
    %113 = vector.extract_strided_slice %76 {offsets = [0, 0, 16], sizes = [2, 16, 8], strides = [1, 1, 1]} : vector<2x16x32xbf16> to vector<2x16x8xbf16>
    %114 = vector.extract_strided_slice %78 {offsets = [0, 0, 16], sizes = [2, 16, 8], strides = [1, 1, 1]} : vector<2x16x32xbf16> to vector<2x16x8xbf16>
    %115 = vector.extract_strided_slice %80 {offsets = [0, 0, 16], sizes = [2, 16, 8], strides = [1, 1, 1]} : vector<2x16x32xbf16> to vector<2x16x8xbf16>
    "tpu.trace_start"() <{level = 10 : i32, message = "bqd,bkd->bqk"}> : () -> ()
    %cst_38 = arith.constant dense<0.000000e+00> : vector<2x16x16xf32>
    %116 = tpu.matmul %113, %114, %cst_38 {dimension_numbers = #tpu.dot_dimension_numbers<[2], [2], [1], [1], [0, 0, 0, 1, 1, 1], [0], [0]>} : vector<2x16x8xbf16>, vector<2x16x8xbf16>, vector<2x16x16xf32> -> vector<2x16x16xf32>
    "tpu.trace_stop"() : () -> ()
    %cst_39 = arith.constant dense<0xFF800000> : vector<2x16xf32>
    %117 = vector.multi_reduction <maximumf>, %116, %cst_39 [2] : vector<2x16x16xf32> to vector<2x16xf32>
    %118 = vector.shape_cast %117 : vector<2x16xf32> to vector<2x16x1xf32>
    %119 = vector.broadcast %118 : vector<2x16x1xf32> to vector<2x16x16xf32>
    %120 = arith.subf %116, %119 : vector<2x16x16xf32>
    %121 = math.exp %120 : vector<2x16x16xf32>
    %cst_40 = arith.constant dense<0.000000e+00> : vector<2x16xf32>
    %122 = vector.multi_reduction <add>, %121, %cst_40 [2] : vector<2x16x16xf32> to vector<2x16xf32>
    %123 = vector.shape_cast %122 : vector<2x16xf32> to vector<2x16x1xf32>
    %124 = tpu.reciprocal %123 {approx = true} : vector<2x16x1xf32> -> vector<2x16x1xf32>
    %125 = vector.broadcast %124 : vector<2x16x1xf32> to vector<2x16x16xf32>
    %126 = arith.mulf %121, %125 : vector<2x16x16xf32>
    %127 = arith.truncf %126 : vector<2x16x16xf32> to vector<2x16x16xbf16>
    "tpu.trace_start"() <{level = 10 : i32, message = "bqk,bkd->bqd"}> : () -> ()
    %cst_41 = arith.constant dense<0.000000e+00> : vector<2x16x8xf32>
    %128 = tpu.matmul %127, %115, %cst_41 {dimension_numbers = #tpu.dot_dimension_numbers<[2], [1], [1], [2], [0, 0, 0, 1, 1, 2], [0], [0]>} : vector<2x16x16xbf16>, vector<2x16x8xbf16>, vector<2x16x8xf32> -> vector<2x16x8xf32>
    "tpu.trace_stop"() : () -> ()
    %129 = vector.extract_strided_slice %76 {offsets = [0, 0, 24], sizes = [2, 16, 8], strides = [1, 1, 1]} : vector<2x16x32xbf16> to vector<2x16x8xbf16>
    %130 = vector.extract_strided_slice %78 {offsets = [0, 0, 24], sizes = [2, 16, 8], strides = [1, 1, 1]} : vector<2x16x32xbf16> to vector<2x16x8xbf16>
    %131 = vector.extract_strided_slice %80 {offsets = [0, 0, 24], sizes = [2, 16, 8], strides = [1, 1, 1]} : vector<2x16x32xbf16> to vector<2x16x8xbf16>
    "tpu.trace_start"() <{level = 10 : i32, message = "bqd,bkd->bqk"}> : () -> ()
    %cst_42 = arith.constant dense<0.000000e+00> : vector<2x16x16xf32>
    %132 = tpu.matmul %129, %130, %cst_42 {dimension_numbers = #tpu.dot_dimension_numbers<[2], [2], [1], [1], [0, 0, 0, 1, 1, 1], [0], [0]>} : vector<2x16x8xbf16>, vector<2x16x8xbf16>, vector<2x16x16xf32> -> vector<2x16x16xf32>
    "tpu.trace_stop"() : () -> ()
    %cst_43 = arith.constant dense<0xFF800000> : vector<2x16xf32>
    %133 = vector.multi_reduction <maximumf>, %132, %cst_43 [2] : vector<2x16x16xf32> to vector<2x16xf32>
    %134 = vector.shape_cast %133 : vector<2x16xf32> to vector<2x16x1xf32>
    %135 = vector.broadcast %134 : vector<2x16x1xf32> to vector<2x16x16xf32>
    %136 = arith.subf %132, %135 : vector<2x16x16xf32>
    %137 = math.exp %136 : vector<2x16x16xf32>
    %cst_44 = arith.constant dense<0.000000e+00> : vector<2x16xf32>
    %138 = vector.multi_reduction <add>, %137, %cst_44 [2] : vector<2x16x16xf32> to vector<2x16xf32>
    %139 = vector.shape_cast %138 : vector<2x16xf32> to vector<2x16x1xf32>
    %140 = tpu.reciprocal %139 {approx = true} : vector<2x16x1xf32> -> vector<2x16x1xf32>
    %141 = vector.broadcast %140 : vector<2x16x1xf32> to vector<2x16x16xf32>
    %142 = arith.mulf %137, %141 : vector<2x16x16xf32>
    %143 = arith.truncf %142 : vector<2x16x16xf32> to vector<2x16x16xbf16>
    "tpu.trace_start"() <{level = 10 : i32, message = "bqk,bkd->bqd"}> : () -> ()
    %cst_45 = arith.constant dense<0.000000e+00> : vector<2x16x8xf32>
    %144 = tpu.matmul %143, %131, %cst_45 {dimension_numbers = #tpu.dot_dimension_numbers<[2], [1], [1], [2], [0, 0, 0, 1, 1, 2], [0], [0]>} : vector<2x16x16xbf16>, vector<2x16x8xbf16>, vector<2x16x8xf32> -> vector<2x16x8xf32>
    "tpu.trace_stop"() : () -> ()
    %145 = tpu.concatenate %96, %112, %128, %144 in 2 : vector<2x16x8xf32>, vector<2x16x8xf32>, vector<2x16x8xf32>, vector<2x16x8xf32> -> vector<2x16x32xf32>
    %146 = vector.shape_cast %145 : vector<2x16x32xf32> to vector<32x32xf32>
    %147 = arith.truncf %146 : vector<32x32xf32> to vector<32x32xbf16>
    %c0_46 = arith.constant 0 : index
    %c0_47 = arith.constant 0 : index
    %148 = vector.load %arg5[%c0_46, %c0_47] : memref<32x32xf32, #tpu.memory_space<vmem>>, vector<32x32xf32>
    %149 = arith.truncf %148 : vector<32x32xf32> to vector<32x32xbf16>
    %cst_48 = arith.constant dense<0.000000e+00> : vector<32x32xf32>
    %150 = tpu.matmul %147, %149, %cst_48 {dimension_numbers = #tpu.dot_dimension_numbers<[1], [0], [0], [1], [0, 0, 1, 1], [], []>} : vector<32x32xbf16>, vector<32x32xbf16>, vector<32x32xf32> -> vector<32x32xf32>
    %c0_49 = arith.constant 0 : index
    %c0_50 = arith.constant 0 : index
    %151 = vector.load %arg6[%c0_49, %c0_50] : memref<1x32xf32, #tpu.memory_space<vmem>>, vector<1x32xf32>
    %152 = vector.broadcast %151 : vector<1x32xf32> to vector<32x32xf32>
    %153 = arith.addf %150, %152 : vector<32x32xf32>
    %154 = arith.addf %153, %62 : vector<32x32xf32>
    %c0_51 = arith.constant 0 : index
    %c0_52 = arith.constant 0 : index
    %155 = vector.load %arg7[%c0_51, %c0_52] : memref<1x32xf32, #tpu.memory_space<vmem>>, vector<1x32xf32>
    %c0_53 = arith.constant 0 : index
    %c0_54 = arith.constant 0 : index
    %156 = vector.load %arg8[%c0_53, %c0_54] : memref<1x32xf32, #tpu.memory_space<vmem>>, vector<1x32xf32>
    %cst_55 = arith.constant dense<0.000000e+00> : vector<32xf32>
    %157 = vector.multi_reduction <add>, %154, %cst_55 [1] : vector<32x32xf32> to vector<32xf32>
    %158 = vector.shape_cast %157 : vector<32xf32> to vector<32x1xf32>
    %cst_56 = arith.constant 3.200000e+01 : f32
    %159 = vector.broadcast %cst_56 : f32 to vector<32x1xf32>
    %160 = arith.divf %158, %159 : vector<32x1xf32>
    %161 = vector.broadcast %160 : vector<32x1xf32> to vector<32x32xf32>
    %162 = arith.subf %154, %161 : vector<32x32xf32>
    %163 = arith.mulf %162, %162 : vector<32x32xf32>
    %cst_57 = arith.constant dense<0.000000e+00> : vector<32xf32>
    %164 = vector.multi_reduction <add>, %163, %cst_57 [1] : vector<32x32xf32> to vector<32xf32>
    %165 = vector.shape_cast %164 : vector<32xf32> to vector<32x1xf32>
    %cst_58 = arith.constant 3.200000e+01 : f32
    %166 = vector.broadcast %cst_58 : f32 to vector<32x1xf32>
    %167 = arith.divf %165, %166 : vector<32x1xf32>
    %168 = vector.broadcast %160 : vector<32x1xf32> to vector<32x32xf32>
    %169 = arith.subf %154, %168 : vector<32x32xf32>
    %cst_59 = arith.constant 9.99999974E-6 : f32
    %170 = vector.broadcast %cst_59 : f32 to vector<32x1xf32>
    %171 = arith.addf %167, %170 : vector<32x1xf32>
    %172 = math.rsqrt %171 : vector<32x1xf32>
    %173 = vector.broadcast %172 : vector<32x1xf32> to vector<32x32xf32>
    %174 = arith.mulf %169, %173 : vector<32x32xf32>
    %175 = vector.broadcast %155 : vector<1x32xf32> to vector<32x32xf32>
    %176 = arith.mulf %174, %175 : vector<32x32xf32>
    %177 = vector.broadcast %156 : vector<1x32xf32> to vector<32x32xf32>
    %178 = arith.addf %176, %177 : vector<32x32xf32>
    %179 = arith.truncf %178 : vector<32x32xf32> to vector<32x32xbf16>
    %c0_60 = arith.constant 0 : index
    %c0_61 = arith.constant 0 : index
    %180 = vector.load %arg9[%c0_60, %c0_61] : memref<32x64xf32, #tpu.memory_space<vmem>>, vector<32x64xf32>
    %181 = arith.truncf %180 : vector<32x64xf32> to vector<32x64xbf16>
    %cst_62 = arith.constant dense<0.000000e+00> : vector<32x64xf32>
    %182 = tpu.matmul %179, %181, %cst_62 {dimension_numbers = #tpu.dot_dimension_numbers<[1], [0], [0], [1], [0, 0, 1, 1], [], []>} : vector<32x32xbf16>, vector<32x64xbf16>, vector<32x64xf32> -> vector<32x64xf32>
    %c0_63 = arith.constant 0 : index
    %c0_64 = arith.constant 0 : index
    %183 = vector.load %arg10[%c0_63, %c0_64] : memref<1x64xf32, #tpu.memory_space<vmem>>, vector<1x64xf32>
    %184 = vector.broadcast %183 : vector<1x64xf32> to vector<32x64xf32>
    %185 = arith.addf %182, %184 : vector<32x64xf32>
    %cst_65 = arith.constant 0.000000e+00 : f32
    %186 = vector.broadcast %cst_65 : f32 to vector<32x64xf32>
    %187 = arith.maximumf %185, %186 : vector<32x64xf32>
    %188 = arith.truncf %187 : vector<32x64xf32> to vector<32x64xbf16>
    %c0_66 = arith.constant 0 : index
    %c0_67 = arith.constant 0 : index
    %189 = vector.load %arg11[%c0_66, %c0_67] : memref<64x32xf32, #tpu.memory_space<vmem>>, vector<64x32xf32>
    %190 = arith.truncf %189 : vector<64x32xf32> to vector<64x32xbf16>
    %cst_68 = arith.constant dense<0.000000e+00> : vector<32x32xf32>
    %191 = tpu.matmul %188, %190, %cst_68 {dimension_numbers = #tpu.dot_dimension_numbers<[1], [0], [0], [1], [0, 0, 1, 1], [], []>} : vector<32x64xbf16>, vector<64x32xbf16>, vector<32x32xf32> -> vector<32x32xf32>
    %c0_69 = arith.constant 0 : index
    %c0_70 = arith.constant 0 : index
    %192 = vector.load %arg12[%c0_69, %c0_70] : memref<1x32xf32, #tpu.memory_space<vmem>>, vector<1x32xf32>
    %193 = vector.broadcast %192 : vector<1x32xf32> to vector<32x32xf32>
    %194 = arith.addf %191, %193 : vector<32x32xf32>
    %195 = arith.addf %194, %178 : vector<32x32xf32>
    %c0_71 = arith.constant 0 : index
    %c0_72 = arith.constant 0 : index
    %196 = vector.load %arg13[%c0_71, %c0_72] : memref<1x32xf32, #tpu.memory_space<vmem>>, vector<1x32xf32>
    %c0_73 = arith.constant 0 : index
    %c0_74 = arith.constant 0 : index
    %197 = vector.load %arg14[%c0_73, %c0_74] : memref<1x32xf32, #tpu.memory_space<vmem>>, vector<1x32xf32>
    %cst_75 = arith.constant dense<0.000000e+00> : vector<32xf32>
    %198 = vector.multi_reduction <add>, %195, %cst_75 [1] : vector<32x32xf32> to vector<32xf32>
    %199 = vector.shape_cast %198 : vector<32xf32> to vector<32x1xf32>
    %cst_76 = arith.constant 3.200000e+01 : f32
    %200 = vector.broadcast %cst_76 : f32 to vector<32x1xf32>
    %201 = arith.divf %199, %200 : vector<32x1xf32>
    %202 = vector.broadcast %201 : vector<32x1xf32> to vector<32x32xf32>
    %203 = arith.subf %195, %202 : vector<32x32xf32>
    %204 = arith.mulf %203, %203 : vector<32x32xf32>
    %cst_77 = arith.constant dense<0.000000e+00> : vector<32xf32>
    %205 = vector.multi_reduction <add>, %204, %cst_77 [1] : vector<32x32xf32> to vector<32xf32>
    %206 = vector.shape_cast %205 : vector<32xf32> to vector<32x1xf32>
    %cst_78 = arith.constant 3.200000e+01 : f32
    %207 = vector.broadcast %cst_78 : f32 to vector<32x1xf32>
    %208 = arith.divf %206, %207 : vector<32x1xf32>
    %209 = vector.broadcast %201 : vector<32x1xf32> to vector<32x32xf32>
    %210 = arith.subf %195, %209 : vector<32x32xf32>
    %cst_79 = arith.constant 9.99999974E-6 : f32
    %211 = vector.broadcast %cst_79 : f32 to vector<32x1xf32>
    %212 = arith.addf %208, %211 : vector<32x1xf32>
    %213 = math.rsqrt %212 : vector<32x1xf32>
    %214 = vector.broadcast %213 : vector<32x1xf32> to vector<32x32xf32>
    %215 = arith.mulf %210, %214 : vector<32x32xf32>
    %216 = vector.broadcast %196 : vector<1x32xf32> to vector<32x32xf32>
    %217 = arith.mulf %215, %216 : vector<32x32xf32>
    %218 = vector.broadcast %197 : vector<1x32xf32> to vector<32x32xf32>
    %219 = arith.addf %217, %218 : vector<32x32xf32>
    %220 = vector.shape_cast %219 : vector<32x32xf32> to vector<2x16x32xf32>
    %c0_80 = arith.constant 0 : index
    %c0_81 = arith.constant 0 : index
    %c0_82 = arith.constant 0 : index
    %221 = vector.load %arg15[%c0_80, %c0_81, %c0_82] : memref<2x16x32xf32, #tpu.memory_space<vmem>>, vector<2x16x32xf32>
    tpu.vector_store %arg15[%c0_80, %c0_81, %c0_82], %220 {strides = array<i32>} : memref<2x16x32xf32, #tpu.memory_space<vmem>>, vector<2x16x32xf32>,
    return
  }
}

</mosaic_0001>

<llo_original>
// kernel: tpu_custom_call.1
$region0: #{tpu_custom_call.1}
  #allocation0 [shape = 'u32[]', space=smem, size = 0x4, offset = 0x4, fixed_abs, tag = 'smem constant byte address 0x4 - core index']
  #allocation1 [shape = 'u32[144,128]{1,0:T(1,128)}', space=vmem, size = 0x12000, scoped, tag = 'internal scratch']
  %s0 = inlined_call_operand.vmem [shape: f32[2,16,32], index: 0, kind: input, shape index: {}]
  %s1 = inlined_call_operand.vmem [shape: f32[3,160,32], index: 1, kind: input, shape index: {}]
  %s2 = inlined_call_operand.vmem [shape: f32[3,1,32], index: 2, kind: input, shape index: {}]
  %s3 = inlined_call_operand.vmem [shape: f32[32,96], index: 3, kind: input, shape index: {}]
  %s4 = inlined_call_operand.vmem [shape: f32[1,96], index: 4, kind: input, shape index: {}]
  %s5 = inlined_call_operand.vmem [shape: f32[32,32], index: 5, kind: input, shape index: {}]
  %s6 = inlined_call_operand.vmem [shape: f32[1,32], index: 6, kind: input, shape index: {}]
  %s7 = inlined_call_operand.vmem [shape: f32[1,32], index: 7, kind: input, shape index: {}]
  %s8 = inlined_call_operand.vmem [shape: f32[1,32], index: 8, kind: input, shape index: {}]
  %s9 = inlined_call_operand.vmem [shape: f32[32,64], index: 9, kind: input, shape index: {}]
  %s10 = inlined_call_operand.vmem [shape: f32[1,64], index: 10, kind: input, shape index: {}]
  %s11 = inlined_call_operand.vmem [shape: f32[64,32], index: 11, kind: input, shape index: {}]
  %s12 = inlined_call_operand.vmem [shape: f32[1,32], index: 12, kind: input, shape index: {}]
  %s13 = inlined_call_operand.vmem [shape: f32[1,32], index: 13, kind: input, shape index: {}]
  %s14 = inlined_call_operand.vmem [shape: f32[1,32], index: 14, kind: input, shape index: {}]
  %s15 = inlined_call_operand.hbm [shape: f32[2,16,32], index: 15, kind: output, shape index: {}]
  %s16 = sld [smem:[#allocation0]]
  $region70: #{tpu_custom_call.1} parent=0
    _
  %s18 = ssub.s32 1, %s16
  %s19 = scalar_select 0, %s18, %s16
  $region1: #{tpu_custom_call.1} parent=0
    #allocation2 [shape = 'u8[16384]{0}', space=vmem, size = 0x4000, scoped, tag = 'output window, operand 0, single buffered']
    #allocation3 [shape = 's32[1]{0}', space=sflag, size = 0x4, scoped, tag = 'scoped memory for tpu_custom_call.1']
    %20 = vsyncpa [#allocation3], 0
    // Predicated region
    $region2: #{tpu_custom_call.1} parent=1 // pred_check
      _
    $region3: #{tpu_custom_call.1} parent=1 // pred_check_branch
      %22 = sbr.rel (0) target = $region5
    $region4: #{tpu_custom_call.1} parent=1 // pred_region
      _
    $region5: #{tpu_custom_call.1} parent=1 // pred_fallthru
      _
    // Predicated region
    $region6: #{tpu_custom_call.1} parent=1 // pred_check
      _
    $region7: #{tpu_custom_call.1} parent=1 // pred_check_branch
      %24 = sbr.rel (0) target = $region9
    $region8: #{tpu_custom_call.1} parent=1 // pred_region
      _
    $region9: #{tpu_custom_call.1} parent=1 // pred_fallthru
      _
    // Predicated region
    $region10: #{tpu_custom_call.1} parent=1 // pred_check
      _
    $region11: #{tpu_custom_call.1} parent=1 // pred_check_branch
      %26 = sbr.rel (0) target = $region13
    $region12: #{tpu_custom_call.1} parent=1 // pred_region
      _
    $region13: #{tpu_custom_call.1} parent=1 // pred_fallthru
      _
    // Predicated region
    $region14: #{tpu_custom_call.1} parent=1 // pred_check
      _
    $region15: #{tpu_custom_call.1} parent=1 // pred_check_branch
      %28 = sbr.rel (0) target = $region17
    $region16: #{tpu_custom_call.1} parent=1 // pred_region
      _
    $region17: #{tpu_custom_call.1} parent=1 // pred_fallthru
      _
    // Predicated region
    $region18: #{tpu_custom_call.1} parent=1 // pred_check
      _
    $region19: #{tpu_custom_call.1} parent=1 // pred_check_branch
      %30 = sbr.rel (0) target = $region21
    $region20: #{tpu_custom_call.1} parent=1 // pred_region
      _
    $region21: #{tpu_custom_call.1} parent=1 // pred_fallthru
      _
    // Predicated region
    $region22: #{tpu_custom_call.1} parent=1 // pred_check
      _
    $region23: #{tpu_custom_call.1} parent=1 // pred_check_branch
      %32 = sbr.rel (0) target = $region25
    $region24: #{tpu_custom_call.1} parent=1 // pred_region
      _
    $region25: #{tpu_custom_call.1} parent=1 // pred_fallthru
      _
    // Predicated region
    $region26: #{tpu_custom_call.1} parent=1 // pred_check
      _
    $region27: #{tpu_custom_call.1} parent=1 // pred_check_branch
      %34 = sbr.rel (0) target = $region29
    $region28: #{tpu_custom_call.1} parent=1 // pred_region
      _
    $region29: #{tpu_custom_call.1} parent=1 // pred_fallthru
      _
    // Predicated region
    $region30: #{tpu_custom_call.1} parent=1 // pred_check
      _
    $region31: #{tpu_custom_call.1} parent=1 // pred_check_branch
      %36 = sbr.rel (0) target = $region33
    $region32: #{tpu_custom_call.1} parent=1 // pred_region
      _
    $region33: #{tpu_custom_call.1} parent=1 // pred_fallthru
      _
    // Predicated region
    $region34: #{tpu_custom_call.1} parent=1 // pred_check
      _
    $region35: #{tpu_custom_call.1} parent=1 // pred_check_branch
      %38 = sbr.rel (0) target = $region37
    $region36: #{tpu_custom_call.1} parent=1 // pred_region
      _
    $region37: #{tpu_custom_call.1} parent=1 // pred_fallthru
      _
    // Predicated region
    $region38: #{tpu_custom_call.1} parent=1 // pred_check
      _
    $region39: #{tpu_custom_call.1} parent=1 // pred_check_branch
      %40 = sbr.rel (0) target = $region41
    $region40: #{tpu_custom_call.1} parent=1 // pred_region
      _
    $region41: #{tpu_custom_call.1} parent=1 // pred_fallthru
      _
    // Predicated region
    $region42: #{tpu_custom_call.1} parent=1 // pred_check
      _
    $region43: #{tpu_custom_call.1} parent=1 // pred_check_branch
      %42 = sbr.rel (0) target = $region45
    $region44: #{tpu_custom_call.1} parent=1 // pred_region
      _
    $region45: #{tpu_custom_call.1} parent=1 // pred_fallthru
      _
    // Predicated region
    $region46: #{tpu_custom_call.1} parent=1 // pred_check
      _
    $region47: #{tpu_custom_call.1} parent=1 // pred_check_branch
      %44 = sbr.rel (0) target = $region49
    $region48: #{tpu_custom_call.1} parent=1 // pred_region
      _
    $region49: #{tpu_custom_call.1} parent=1 // pred_fallthru
      _
    // Predicated region
    $region50: #{tpu_custom_call.1} parent=1 // pred_check
      _
    $region51: #{tpu_custom_call.1} parent=1 // pred_check_branch
      %46 = sbr.rel (0) target = $region53
    $region52: #{tpu_custom_call.1} parent=1 // pred_region
      _
    $region53: #{tpu_custom_call.1} parent=1 // pred_fallthru
      _
    // Predicated region
    $region54: #{tpu_custom_call.1} parent=1 // pred_check
      _
    $region55: #{tpu_custom_call.1} parent=1 // pred_check_branch
      %48 = sbr.rel (0) target = $region57
    $region56: #{tpu_custom_call.1} parent=1 // pred_region
      _
    $region57: #{tpu_custom_call.1} parent=1 // pred_fallthru
      _
    // Predicated region
    $region58: #{tpu_custom_call.1} parent=1 // pred_check
      _
    $region59: #{tpu_custom_call.1} parent=1 // pred_check_branch
      %50 = sbr.rel (0) target = $region61
    $region60: #{tpu_custom_call.1} parent=1 // pred_region
      _
    $region61: #{tpu_custom_call.1} parent=1 // pred_fallthru
      _
    %v52 = vld [vmem:[%s0] sm:$0xff]
    %v53 = vld [vmem:[%s0 + $0x8] sm:$0xff]
    %v54 = vld [vmem:[%s0 + $0x10] sm:$0xff]
    %v55 = vld [vmem:[%s0 + $0x18] sm:$0xff]
    %vm60 = vcmask 1041408
    %v61 = vrot.slane %v52, 6
    %v62 = vrot.slane %v53, 6
    %v63 = vsel %vm60, %v61, %v62
    %v64 = vrot.slane %v54, 6
    %v65 = vrot.slane %v55, 6
    %v66 = vsel %vm60, %v64, %v65
    %v73 = vsel %vm60, 0.0, %v61
    %v74 = vsel %vm60, 0.0, %v64
    %v75 = vsel %vm60, %v62, 0.0
    %v76 = vsel %vm60, %v65, 0.0
    %vm81 = vcmask 1046528
    %v82 = vrot.slane %v73, 1
    %v83 = vrot.slane %v63, 1
    %v84 = vsel %vm81, %v82, %v83
    %v85 = vrot.slane %v75, 1
    %v86 = vsel %vm81, %v83, %v85
    %v87 = vrot.slane %v74, 1
    %v88 = vrot.slane %v66, 1
    %v89 = vsel %vm81, %v87, %v88
    %v90 = vrot.slane %v76, 1
    %v91 = vsel %vm81, %v88, %v90
    %92 = vrot.lane.b32.xlu0 %v84, 32
    %v93 = vpop.permute.xlu0 %92
    %94 = vrot.lane.b32.xlu0 %v86, 32
    %v95 = vpop.permute.xlu0 %94
    %96 = vrot.lane.b32.xlu0 %v89, 32
    %v97 = vpop.permute.xlu0 %96
    %98 = vrot.lane.b32.xlu0 %v91, 32
    %v99 = vpop.permute.xlu0 %98
    %vm104 = vcmask 1045504
    %v105 = vrot.slane %v73, 2
    %v106 = vrot.slane %v63, 2
    %v107 = vsel %vm104, %v105, %v106
    %v108 = vrot.slane %v75, 2
    %v109 = vsel %vm104, %v106, %v108
    %v110 = vrot.slane %v74, 2
    %v111 = vrot.slane %v66, 2
    %v112 = vsel %vm104, %v110, %v111
    %v113 = vrot.slane %v76, 2
    %v114 = vsel %vm104, %v111, %v113
    %115 = vrot.lane.b32.xlu0 %v107, 64
    %v116 = vpop.permute.xlu0 %115
    %117 = vrot.lane.b32.xlu0 %v109, 64
    %v118 = vpop.permute.xlu0 %117
    %119 = vrot.lane.b32.xlu0 %v112, 64
    %v120 = vpop.permute.xlu0 %119
    %121 = vrot.lane.b32.xlu0 %v114, 64
    %v122 = vpop.permute.xlu0 %121
    %vm127 = vcmask 1044480
    %v128 = vrot.slane %v73, 3
    %v129 = vrot.slane %v63, 3
    %v130 = vsel %vm127, %v128, %v129
    %v131 = vrot.slane %v75, 3
    %v132 = vsel %vm127, %v129, %v131
    %v133 = vrot.slane %v74, 3
    %v134 = vrot.slane %v66, 3
    %v135 = vsel %vm127, %v133, %v134
    %v136 = vrot.slane %v76, 3
    %v137 = vsel %vm127, %v134, %v136
    %138 = vrot.lane.b32.xlu0 %v130, 96
    %v139 = vpop.permute.xlu0 %138
    %140 = vrot.lane.b32.xlu0 %v132, 96
    %v141 = vpop.permute.xlu0 %140
    %142 = vrot.lane.b32.xlu0 %v135, 96
    %v143 = vpop.permute.xlu0 %142
    %144 = vrot.lane.b32.xlu0 %v137, 96
    %v145 = vpop.permute.xlu0 %144
    %vm150 = vcmask 1043456
    %v151 = vrot.slane %v73, 4
    %v152 = vrot.slane %v63, 4
    %v153 = vsel %vm150, %v151, %v152
    %v154 = vrot.slane %v75, 4
    %v155 = vsel %vm150, %v152, %v154
    %v156 = vrot.slane %v74, 4
    %v157 = vrot.slane %v66, 4
    %v158 = vsel %vm150, %v156, %v157
    %v159 = vrot.slane %v76, 4
    %v160 = vsel %vm150, %v157, %v159
    %vm165 = vcmask 261120
    %v166 = vsel %vm165, %v73, %v93
    %v167 = vsel %vm165, %v63, %v95
    %v168 = vsel %vm165, %v74, %v97
    %v169 = vsel %vm165, %v66, %v99
    %vm170 = vcmask 523264
    %v171 = vsel %vm170, %v166, %v116
    %v172 = vsel %vm170, %v167, %v118
    %v173 = vsel %vm170, %v168, %v120
    %v174 = vsel %vm170, %v169, %v122
    %vm175 = vcmask 785408
    %v176 = vsel %vm175, %v171, %v139
    %v177 = vsel %vm175, %v172, %v141
    %v178 = vsel %vm175, %v173, %v143
    %v179 = vsel %vm175, %v174, %v145
    %v180 = vpack.c.bf16 %v177, %v176
    %v181 = vpack.c.bf16 %v155, %v153
    %v182 = vpack.c.bf16 %v179, %v178
    %v183 = vpack.c.bf16 %v160, %v158
    %v184 = vld [vmem:[%s1] sm:$0xff]
    %v185 = vld [vmem:[%s1 + $0x8] sm:$0xff]
    %v186 = vld [vmem:[%s1 + $0x10] sm:$0xff]
    %v187 = vld [vmem:[%s1 + $0x18] sm:$0xff]
    %v188 = vld [vmem:[%s1 + $0x20] sm:$0xff]
    %v189 = vld [vmem:[%s1 + $0x28] sm:$0xff]
    %v190 = vld [vmem:[%s1 + $0x30] sm:$0xff]
    %v191 = vld [vmem:[%s1 + $0x38] sm:$0xff]
    %v192 = vld [vmem:[%s1 + $0x40] sm:$0xff]
    %v193 = vld [vmem:[%s1 + $0x48] sm:$0xff]
    %v194 = vld [vmem:[%s1 + $0x50] sm:$0xff]
    %v195 = vld [vmem:[%s1 + $0x58] sm:$0xff]
    %v196 = vld [vmem:[%s1 + $0x60] sm:$0xff]
    %v197 = vld [vmem:[%s1 + $0x68] sm:$0xff]
    %v198 = vld [vmem:[%s1 + $0x70] sm:$0xff]
    %v199 = vld [vmem:[%s1 + $0x78] sm:$0xff]
    %v200 = vld [vmem:[%s1 + $0x80] sm:$0xff]
    %v201 = vld [vmem:[%s1 + $0x88] sm:$0xff]
    %v202 = vld [vmem:[%s1 + $0x90] sm:$0xff]
    %v203 = vld [vmem:[%s1 + $0x98] sm:$0xff]
    %v204 = vpack.c.bf16 %v185, %v184
    %v205 = vpack.c.bf16 %v187, %v186
    %v206 = vpack.c.bf16 %v189, %v188
    %v207 = vpack.c.bf16 %v191, %v190
    %v208 = vpack.c.bf16 %v193, %v192
    %v209 = vpack.c.bf16 %v195, %v194
    %v210 = vpack.c.bf16 %v197, %v196
    %v211 = vpack.c.bf16 %v199, %v198
    %v212 = vpack.c.bf16 %v201, %v200
    %v213 = vpack.c.bf16 %v203, %v202
    %v214 = vld [vmem:[%s2] sm:$0x1]
    %v216 = vlaneseq
    %v217 = vshrl.u32 %v216, 7
    %v218 = vsub.s32 0, %v217
    %v219 = vrot.slane %v214, %v218
    %v222 = vsel %vm165, %v181, 0
    %v225 = vsel %vm165, %v183, 0
    %227 = vmatprep.subr.bf16.mxu0 0
    %228 = vmatpush1.bf16.msra.mxu0 %v211
    %229 = vmatprep.subr.bf16.mxu0 0
    %230 = vmatpush1.bf16.msra.mxu0 %v210
    %231 = vmatprep.subr.bf16.mxu0 0
    %232 = vmatpush1.bf16.msra.mxu0 %v209
    %233 = vmatprep.subr.bf16.mxu0 0
    %234 = vmatpush1.bf16.msra.mxu0 %v208
    %235 = vmatprep.subr.bf16.mxu0 0
    %236 = vmatpush1.bf16.msra.mxu0 %v207
    %237 = vmatprep.subr.bf16.mxu0 0
    %238 = vmatpush1.bf16.msra.mxu0 %v206
    %239 = vmatprep.subr.bf16.mxu0 0
    %240 = vmatpush1.bf16.msra.mxu0 %v205
    %241 = vmatprep.subr.bf16.mxu0 0
    %242 = vmatpush1.bf16.msra.mxu0 %v204
    %243 = vmatprep.subr.bf16.mxu0 0
    %244 = vmatpush2.bf16.msra.mxu0 0
    %245 = vmatprep.subr.bf16.mxu0 0
    %246 = vmatpush2.bf16.msra.mxu0 0
    %247 = vmatprep.subr.bf16.mxu0 0
    %248 = vmatpush2.bf16.msra.mxu0 0
    %249 = vmatprep.subr.bf16.mxu0 0
    %250 = vmatpush2.bf16.msra.mxu0 0
    %251 = vmatprep.subr.bf16.mxu0 0
    %252 = vmatpush2.bf16.msra.mxu0 0
    %253 = vmatprep.subr.bf16.mxu0 0
    %254 = vmatpush2.bf16.msra.mxu0 0
    %255 = vmatprep.subr.bf16.mxu0 0
    %256 = vmatpush2.bf16.msra.mxu0 %v213
    %257 = vmatprep.subr.bf16.mxu0 0
    %258 = vmatpush2.bf16.msra.mxu0 %v212
    %259 = vmatprep.mubr.bf16.mxu0 %v222
    %260 = vmatmul.mubr.bf16.gmra.mxu0 %v180
    %v261 = vpop.f32.mrf.mxu0
    %v262 = vadd.f32 %v219, %v261
    %v263 = vpop.f32.mrf.mxu0
    %v264 = vpop.f32.mrf.mxu0
    %v265 = vadd.f32 %v219, %v264
    %v266 = vpop.f32.mrf.mxu0
    %267 = vmatprep.mubr.bf16.mxu0 %v225
    %268 = vmatmul.mubr.bf16.gmra.mxu0 %v182
    %v269 = vpop.f32.mrf.mxu0
    %v270 = vadd.f32 %v219, %v269
    %v271 = vpop.f32.mrf.mxu0
    %v272 = vpop.f32.mrf.mxu0
    %v273 = vadd.f32 %v219, %v272
    %v274 = vpop.f32.mrf.mxu0
    %275 = vdwg.mxu0
    %v276 = vmax.f32 %v262, 0.0
    %v277 = vmax.f32 %v265, 0.0
    %v278 = vmax.f32 %v270, 0.0
    %v279 = vmax.f32 %v273, 0.0
    %v284 = vrot.slane %v276, 6
    %v285 = vrot.slane %v277, 6
    %v286 = vsel %vm60, %v284, %v285
    %v287 = vrot.slane %v278, 6
    %v288 = vrot.slane %v279, 6
    %v289 = vsel %vm60, %v287, %v288
    %v296 = vsel %vm60, 0.0, %v284
    %v297 = vsel %vm60, 0.0, %v287
    %v298 = vsel %vm60, %v285, 0.0
    %v299 = vsel %vm60, %v288, 0.0
    %v304 = vrot.slane %v296, 1
    %v305 = vrot.slane %v286, 1
    %v306 = vsel %vm81, %v304, %v305
    %v307 = vrot.slane %v298, 1
    %v308 = vsel %vm81, %v305, %v307
    %v309 = vrot.slane %v297, 1
    %v310 = vrot.slane %v289, 1
    %v311 = vsel %vm81, %v309, %v310
    %v312 = vrot.slane %v299, 1
    %v313 = vsel %vm81, %v310, %v312
    %314 = vrot.lane.b32.xlu0 %v306, 32
    %v315 = vpop.permute.xlu0 %314
    %316 = vrot.lane.b32.xlu0 %v308, 32
    %v317 = vpop.permute.xlu0 %316
    %318 = vrot.lane.b32.xlu0 %v311, 32
    %v319 = vpop.permute.xlu0 %318
    %320 = vrot.lane.b32.xlu0 %v313, 32
    %v321 = vpop.permute.xlu0 %320
    %v326 = vrot.slane %v296, 2
    %v327 = vrot.slane %v286, 2
    %v328 = vsel %vm104, %v326, %v327
    %v329 = vrot.slane %v298, 2
    %v330 = vsel %vm104, %v327, %v329
    %v331 = vrot.slane %v297, 2
    %v332 = vrot.slane %v289, 2
    %v333 = vsel %vm104, %v331, %v332
    %v334 = vrot.slane %v299, 2
    %v335 = vsel %vm104, %v332, %v334
    %336 = vrot.lane.b32.xlu0 %v328, 64
    %v337 = vpop.permute.xlu0 %336
    %338 = vrot.lane.b32.xlu0 %v330, 64
    %v339 = vpop.permute.xlu0 %338
    %340 = vrot.lane.b32.xlu0 %v333, 64
    %v341 = vpop.permute.xlu0 %340
    %342 = vrot.lane.b32.xlu0 %v335, 64
    %v343 = vpop.permute.xlu0 %342
    %v348 = vrot.slane %v296, 3
    %v349 = vrot.slane %v286, 3
    %v350 = vsel %vm127, %v348, %v349
    %v351 = vrot.slane %v298, 3
    %v352 = vsel %vm127, %v349, %v351
    %v353 = vrot.slane %v297, 3
    %v354 = vrot.slane %v289, 3
    %v355 = vsel %vm127, %v353, %v354
    %v356 = vrot.slane %v299, 3
    %v357 = vsel %vm127, %v354, %v356
    %358 = vrot.lane.b32.xlu0 %v350, 96
    %v359 = vpop.permute.xlu0 %358
    %360 = vrot.lane.b32.xlu0 %v352, 96
    %v361 = vpop.permute.xlu0 %360
    %362 = vrot.lane.b32.xlu0 %v355, 96
    %v363 = vpop.permute.xlu0 %362
    %364 = vrot.lane.b32.xlu0 %v357, 96
    %v365 = vpop.permute.xlu0 %364
    %v370 = vrot.slane %v296, 4
    %v371 = vrot.slane %v286, 4
    %v372 = vsel %vm150, %v370, %v371
    %v373 = vrot.slane %v298, 4
    %v374 = vsel %vm150, %v371, %v373
    %v375 = vrot.slane %v297, 4
    %v376 = vrot.slane %v289, 4
    %v377 = vsel %vm150, %v375, %v376
    %v378 = vrot.slane %v299, 4
    %v379 = vsel %vm150, %v376, %v378
    %v384 = vsel %vm165, %v296, %v315
    %v385 = vsel %vm165, %v286, %v317
    %v386 = vsel %vm165, %v297, %v319
    %v387 = vsel %vm165, %v289, %v321
    %v388 = vsel %vm170, %v384, %v337
    %v389 = vsel %vm170, %v385, %v339
    %v390 = vsel %vm170, %v386, %v341
    %v391 = vsel %vm170, %v387, %v343
    %v392 = vsel %vm175, %v388, %v359
    %v393 = vsel %vm175, %v389, %v361
    %v394 = vsel %vm175, %v390, %v363
    %v395 = vsel %vm175, %v391, %v365
    %v396 = vpack.c.bf16 %v393, %v392
    %v397 = vpack.c.bf16 %v374, %v372
    %v398 = vpack.c.bf16 %v395, %v394
    %v399 = vpack.c.bf16 %v379, %v377
    %s400 = scalar_lea.vmem %s1, 160
    %v401 = vld [vmem:[%s400] sm:$0xff]
    %v402 = vld [vmem:[%s400 + $0x8] sm:$0xff]
    %v403 = vld [vmem:[%s400 + $0x10] sm:$0xff]
    %v404 = vld [vmem:[%s400 + $0x18] sm:$0xff]
    %v405 = vld [vmem:[%s400 + $0x20] sm:$0xff]
    %v406 = vld [vmem:[%s400 + $0x28] sm:$0xff]
    %v407 = vld [vmem:[%s400 + $0x30] sm:$0xff]
    %v408 = vld [vmem:[%s400 + $0x38] sm:$0xff]
    %v409 = vld [vmem:[%s400 + $0x40] sm:$0xff]
    %v410 = vld [vmem:[%s400 + $0x48] sm:$0xff]
    %v411 = vld [vmem:[%s400 + $0x50] sm:$0xff]
    %v412 = vld [vmem:[%s400 + $0x58] sm:$0xff]
    %v413 = vld [vmem:[%s400 + $0x60] sm:$0xff]
    %v414 = vld [vmem:[%s400 + $0x68] sm:$0xff]
    %v415 = vld [vmem:[%s400 + $0x70] sm:$0xff]
    %v416 = vld [vmem:[%s400 + $0x78] sm:$0xff]
    %v417 = vld [vmem:[%s400 + $0x80] sm:$0xff]
    %v418 = vld [vmem:[%s400 + $0x88] sm:$0xff]
    %v419 = vld [vmem:[%s400 + $0x90] sm:$0xff]
    %v420 = vld [vmem:[%s400 + $0x98] sm:$0xff]
    %v421 = vpack.c.bf16 %v402, %v401
    %v422 = vpack.c.bf16 %v404, %v403
    %v423 = vpack.c.bf16 %v406, %v405
    %v424 = vpack.c.bf16 %v408, %v407
    %v425 = vpack.c.bf16 %v410, %v409
    %v426 = vpack.c.bf16 %v412, %v411
    %v427 = vpack.c.bf16 %v414, %v413
    %v428 = vpack.c.bf16 %v416, %v415
    %v429 = vpack.c.bf16 %v418, %v417
    %v430 = vpack.c.bf16 %v420, %v419
    %s431 = scalar_lea.vmem %s2, 1
    %v432 = vld [vmem:[%s431] sm:$0x1]
    %v434 = vlaneseq
    %v435 = vshrl.u32 %v434, 7
    %v436 = vsub.s32 0, %v435
    %v437 = vrot.slane %v432, %v436
    %v440 = vsel %vm165, %v397, 0
    %v443 = vsel %vm165, %v399, 0
    %445 = vmatprep.subr.bf16.mxu0 0
    %446 = vmatpush1.bf16.msra.mxu0 %v428
    %447 = vmatprep.subr.bf16.mxu0 0
    %448 = vmatpush1.bf16.msra.mxu0 %v427
    %449 = vmatprep.subr.bf16.mxu0 0
    %450 = vmatpush1.bf16.msra.mxu0 %v426
    %451 = vmatprep.subr.bf16.mxu0 0
    %452 = vmatpush1.bf16.msra.mxu0 %v425
    %453 = vmatprep.subr.bf16.mxu0 0
    %454 = vmatpush1.bf16.msra.mxu0 %v424
    %455 = vmatprep.subr.bf16.mxu0 0
    %456 = vmatpush1.bf16.msra.mxu0 %v423
    %457 = vmatprep.subr.bf16.mxu0 0
    %458 = vmatpush1.bf16.msra.mxu0 %v422
    %459 = vmatprep.subr.bf16.mxu0 0
    %460 = vmatpush1.bf16.msra.mxu0 %v421
    %461 = vmatprep.subr.bf16.mxu0 0
    %462 = vmatpush2.bf16.msra.mxu0 0
    %463 = vmatprep.subr.bf16.mxu0 0
    %464 = vmatpush2.bf16.msra.mxu0 0
    %465 = vmatprep.subr.bf16.mxu0 0
    %466 = vmatpush2.bf16.msra.mxu0 0
    %467 = vmatprep.subr.bf16.mxu0 0
    %468 = vmatpush2.bf16.msra.mxu0 0
    %469 = vmatprep.subr.bf16.mxu0 0
    %470 = vmatpush2.bf16.msra.mxu0 0
    %471 = vmatprep.subr.bf16.mxu0 0
    %472 = vmatpush2.bf16.msra.mxu0 0
    %473 = vmatprep.subr.bf16.mxu0 0
    %474 = vmatpush2.bf16.msra.mxu0 %v430
    %475 = vmatprep.subr.bf16.mxu0 0
    %476 = vmatpush2.bf16.msra.mxu0 %v429
    %477 = vmatprep.mubr.bf16.mxu0 %v440
    %478 = vmatmul.mubr.bf16.gmra.mxu0 %v396
    %v479 = vpop.f32.mrf.mxu0
    %v480 = vadd.f32 %v437, %v479
    %v481 = vpop.f32.mrf.mxu0
    %v482 = vpop.f32.mrf.mxu0
    %v483 = vadd.f32 %v437, %v482
    %v484 = vpop.f32.mrf.mxu0
    %485 = vmatprep.mubr.bf16.mxu0 %v443
    %486 = vmatmul.mubr.bf16.gmra.mxu0 %v398
    %v487 = vpop.f32.mrf.mxu0
    %v488 = vadd.f32 %v437, %v487
    %v489 = vpop.f32.mrf.mxu0
    %v490 = vpop.f32.mrf.mxu0
    %v491 = vadd.f32 %v437, %v490
    %v492 = vpop.f32.mrf.mxu0
    %493 = vdwg.mxu0
    %v494 = vmax.f32 %v480, 0.0
    %v495 = vmax.f32 %v483, 0.0
    %v496 = vmax.f32 %v488, 0.0
    %v497 = vmax.f32 %v491, 0.0
    %v502 = vrot.slane %v494, 6
    %v503 = vrot.slane %v495, 6
    %v504 = vsel %vm60, %v502, %v503
    %v505 = vrot.slane %v496, 6
    %v506 = vrot.slane %v497, 6
    %v507 = vsel %vm60, %v505, %v506
    %v514 = vsel %vm60, 0.0, %v502
    %v515 = vsel %vm60, 0.0, %v505
    %v516 = vsel %vm60, %v503, 0.0
    %v517 = vsel %vm60, %v506, 0.0
    %v522 = vrot.slane %v514, 1
    %v523 = vrot.slane %v504, 1
    %v524 = vsel %vm81, %v522, %v523
    %v525 = vrot.slane %v516, 1
    %v526 = vsel %vm81, %v523, %v525
    %v527 = vrot.slane %v515, 1
    %v528 = vrot.slane %v507, 1
    %v529 = vsel %vm81, %v527, %v528
    %v530 = vrot.slane %v517, 1
    %v531 = vsel %vm81, %v528, %v530
    %532 = vrot.lane.b32.xlu0 %v524, 32
    %v533 = vpop.permute.xlu0 %532
    %534 = vrot.lane.b32.xlu0 %v526, 32
    %v535 = vpop.permute.xlu0 %534
    %536 = vrot.lane.b32.xlu0 %v529, 32
    %v537 = vpop.permute.xlu0 %536
    %538 = vrot.lane.b32.xlu0 %v531, 32
    %v539 = vpop.permute.xlu0 %538
    %v544 = vrot.slane %v514, 2
    %v545 = vrot.slane %v504, 2
    %v546 = vsel %vm104, %v544, %v545
    %v547 = vrot.slane %v516, 2
    %v548 = vsel %vm104, %v545, %v547
    %v549 = vrot.slane %v515, 2
    %v550 = vrot.slane %v507, 2
    %v551 = vsel %vm104, %v549, %v550
    %v552 = vrot.slane %v517, 2
    %v553 = vsel %vm104, %v550, %v552
    %554 = vrot.lane.b32.xlu0 %v546, 64
    %v555 = vpop.permute.xlu0 %554
    %556 = vrot.lane.b32.xlu0 %v548, 64
    %v557 = vpop.permute.xlu0 %556
    %558 = vrot.lane.b32.xlu0 %v551, 64
    %v559 = vpop.permute.xlu0 %558
    %560 = vrot.lane.b32.xlu0 %v553, 64
    %v561 = vpop.permute.xlu0 %560
    %v566 = vrot.slane %v514, 3
    %v567 = vrot.slane %v504, 3
    %v568 = vsel %vm127, %v566, %v567
    %v569 = vrot.slane %v516, 3
    %v570 = vsel %vm127, %v567, %v569
    %v571 = vrot.slane %v515, 3
    %v572 = vrot.slane %v507, 3
    %v573 = vsel %vm127, %v571, %v572
    %v574 = vrot.slane %v517, 3
    %v575 = vsel %vm127, %v572, %v574
    %576 = vrot.lane.b32.xlu0 %v568, 96
    %v577 = vpop.permute.xlu0 %576
    %578 = vrot.lane.b32.xlu0 %v570, 96
    %v579 = vpop.permute.xlu0 %578
    %580 = vrot.lane.b32.xlu0 %v573, 96
    %v581 = vpop.permute.xlu0 %580
    %582 = vrot.lane.b32.xlu0 %v575, 96
    %v583 = vpop.permute.xlu0 %582
    %v588 = vrot.slane %v514, 4
    %v589 = vrot.slane %v504, 4
    %v590 = vsel %vm150, %v588, %v589
    %v591 = vrot.slane %v516, 4
    %v592 = vsel %vm150, %v589, %v591
    %v593 = vrot.slane %v515, 4
    %v594 = vrot.slane %v507, 4
    %v595 = vsel %vm150, %v593, %v594
    %v596 = vrot.slane %v517, 4
    %v597 = vsel %vm150, %v594, %v596
    %v602 = vsel %vm165, %v514, %v533
    %v603 = vsel %vm165, %v504, %v535
    %v604 = vsel %vm165, %v515, %v537
    %v605 = vsel %vm165, %v507, %v539
    %v606 = vsel %vm170, %v602, %v555
    %v607 = vsel %vm170, %v603, %v557
    %v608 = vsel %vm170, %v604, %v559
    %v609 = vsel %vm170, %v605, %v561
    %v610 = vsel %vm175, %v606, %v577
    %v611 = vsel %vm175, %v607, %v579
    %v612 = vsel %vm175, %v608, %v581
    %v613 = vsel %vm175, %v609, %v583
    %v614 = vpack.c.bf16 %v611, %v610
    %v615 = vpack.c.bf16 %v592, %v590
    %v616 = vpack.c.bf16 %v613, %v612
    %v617 = vpack.c.bf16 %v597, %v595
    %s618 = scalar_lea.vmem %s1, 320
    %v619 = vld [vmem:[%s618] sm:$0xff]
    %v620 = vld [vmem:[%s618 + $0x8] sm:$0xff]
    %v621 = vld [vmem:[%s618 + $0x10] sm:$0xff]
    %v622 = vld [vmem:[%s618 + $0x18] sm:$0xff]
    %v623 = vld [vmem:[%s618 + $0x20] sm:$0xff]
    %v624 = vld [vmem:[%s618 + $0x28] sm:$0xff]
    %v625 = vld [vmem:[%s618 + $0x30] sm:$0xff]
    %v626 = vld [vmem:[%s618 + $0x38] sm:$0xff]
    %v627 = vld [vmem:[%s618 + $0x40] sm:$0xff]
    %v628 = vld [vmem:[%s618 + $0x48] sm:$0xff]
    %v629 = vld [vmem:[%s618 + $0x50] sm:$0xff]
    %v630 = vld [vmem:[%s618 + $0x58] sm:$0xff]
    %v631 = vld [vmem:[%s618 + $0x60] sm:$0xff]
    %v632 = vld [vmem:[%s618 + $0x68] sm:$0xff]
    %v633 = vld [vmem:[%s618 + $0x70] sm:$0xff]
    %v634 = vld [vmem:[%s618 + $0x78] sm:$0xff]
    %v635 = vld [vmem:[%s618 + $0x80] sm:$0xff]
    %v636 = vld [vmem:[%s618 + $0x88] sm:$0xff]
    %v637 = vld [vmem:[%s618 + $0x90] sm:$0xff]
    %v638 = vld [vmem:[%s618 + $0x98] sm:$0xff]
    %v639 = vpack.c.bf16 %v620, %v619
    %v640 = vpack.c.bf16 %v622, %v621
    %v641 = vpack.c.bf16 %v624, %v623
    %v642 = vpack.c.bf16 %v626, %v625
    %v643 = vpack.c.bf16 %v628, %v627
    %v644 = vpack.c.bf16 %v630, %v629
    %v645 = vpack.c.bf16 %v632, %v631
    %v646 = vpack.c.bf16 %v634, %v633
    %v647 = vpack.c.bf16 %v636, %v635
    %v648 = vpack.c.bf16 %v638, %v637
    %s649 = scalar_lea.vmem %s2, 2
    %v650 = vld [vmem:[%s649] sm:$0x1]
    %v652 = vlaneseq
    %v653 = vshrl.u32 %v652, 7
    %v654 = vsub.s32 0, %v653
    %v655 = vrot.slane %v650, %v654
    %v658 = vsel %vm165, %v615, 0
    %v661 = vsel %vm165, %v617, 0
    %663 = vmatprep.subr.bf16.mxu0 0
    %664 = vmatpush1.bf16.msra.mxu0 %v646
    %665 = vmatprep.subr.bf16.mxu0 0
    %666 = vmatpush1.bf16.msra.mxu0 %v645
    %667 = vmatprep.subr.bf16.mxu0 0
    %668 = vmatpush1.bf16.msra.mxu0 %v644
    %669 = vmatprep.subr.bf16.mxu0 0
    %670 = vmatpush1.bf16.msra.mxu0 %v643
    %671 = vmatprep.subr.bf16.mxu0 0
    %672 = vmatpush1.bf16.msra.mxu0 %v642
    %673 = vmatprep.subr.bf16.mxu0 0
    %674 = vmatpush1.bf16.msra.mxu0 %v641
    %675 = vmatprep.subr.bf16.mxu0 0
    %676 = vmatpush1.bf16.msra.mxu0 %v640
    %677 = vmatprep.subr.bf16.mxu0 0
    %678 = vmatpush1.bf16.msra.mxu0 %v639
    %679 = vmatprep.subr.bf16.mxu0 0
    %680 = vmatpush2.bf16.msra.mxu0 0
    %681 = vmatprep.subr.bf16.mxu0 0
    %682 = vmatpush2.bf16.msra.mxu0 0
    %683 = vmatprep.subr.bf16.mxu0 0
    %684 = vmatpush2.bf16.msra.mxu0 0
    %685 = vmatprep.subr.bf16.mxu0 0
    %686 = vmatpush2.bf16.msra.mxu0 0
    %687 = vmatprep.subr.bf16.mxu0 0
    %688 = vmatpush2.bf16.msra.mxu0 0
    %689 = vmatprep.subr.bf16.mxu0 0
    %690 = vmatpush2.bf16.msra.mxu0 0
    %691 = vmatprep.subr.bf16.mxu0 0
    %692 = vmatpush2.bf16.msra.mxu0 %v648
    %693 = vmatprep.subr.bf16.mxu0 0
    %694 = vmatpush2.bf16.msra.mxu0 %v647
    %695 = vmatprep.mubr.bf16.mxu0 %v658
    %696 = vmatmul.mubr.bf16.gmra.mxu0 %v614
    %v697 = vpop.f32.mrf.mxu0
    %v698 = vadd.f32 %v655, %v697
    %v699 = vpop.f32.mrf.mxu0
    %v700 = vpop.f32.mrf.mxu0
    %v701 = vadd.f32 %v655, %v700
    %v702 = vpop.f32.mrf.mxu0
    %703 = vmatprep.mubr.bf16.mxu0 %v661
    %704 = vmatmul.mubr.bf16.gmra.mxu0 %v616
    %v705 = vpop.f32.mrf.mxu0
    %v706 = vadd.f32 %v655, %v705
    %v707 = vpop.f32.mrf.mxu0
    %v708 = vpop.f32.mrf.mxu0
    %v709 = vadd.f32 %v655, %v708
    %v710 = vpop.f32.mrf.mxu0
    %711 = vdwg.mxu0
    %v712 = vmax.f32 %v698, 0.0
    %v713 = vmax.f32 %v701, 0.0
    %v714 = vmax.f32 %v706, 0.0
    %v715 = vmax.f32 %v709, 0.0
    %v716 = vpack.c.bf16 %v713, %v712
    %v717 = vpack.c.bf16 %v715, %v714
    %v718 = vld [vmem:[%s3] sm:$0xff]
    %v719 = vld [vmem:[%s3 + $0x8] sm:$0xff]
    %v720 = vld [vmem:[%s3 + $0x10] sm:$0xff]
    %v721 = vld [vmem:[%s3 + $0x18] sm:$0xff]
    %v722 = vpack.c.bf16 %v719, %v718
    %v723 = vpack.c.bf16 %v721, %v720
    %v724 = vld [vmem:[%s4] sm:$0x1]
    %v726 = vlaneseq
    %v727 = vshrl.u32 %v726, 7
    %v728 = vsub.s32 0, %v727
    %v729 = vrot.slane %v724, %v728
    %v732 = vsel %vm165, %v716, 0
    %v735 = vsel %vm165, %v717, 0
    %737 = vmatprep.subr.bf16.mxu0 0
    %738 = vmatpush1.bf16.msra.mxu0 0
    %739 = vmatprep.subr.bf16.mxu0 0
    %740 = vmatpush1.bf16.msra.mxu0 0
    %741 = vmatprep.subr.bf16.mxu0 0
    %742 = vmatpush1.bf16.msra.mxu0 0
    %743 = vmatprep.subr.bf16.mxu0 0
    %744 = vmatpush1.bf16.msra.mxu0 0
    %745 = vmatprep.subr.bf16.mxu0 0
    %746 = vmatpush1.bf16.msra.mxu0 0
    %747 = vmatprep.subr.bf16.mxu0 0
    %748 = vmatpush1.bf16.msra.mxu0 0
    %749 = vmatprep.subr.bf16.mxu0 0
    %750 = vmatpush1.bf16.msra.mxu0 %v723
    %751 = vmatprep.subr.bf16.mxu0 0
    %752 = vmatpush1.bf16.msra.mxu0 %v722
    %753 = vmatprep.subr.bf16.mxu0 0
    %754 = vmatpush2.bf16.msra.mxu0 0
    %755 = vmatprep.subr.bf16.mxu0 0
    %756 = vmatpush2.bf16.msra.mxu0 0
    %757 = vmatprep.subr.bf16.mxu0 0
    %758 = vmatpush2.bf16.msra.mxu0 0
    %759 = vmatprep.subr.bf16.mxu0 0
    %760 = vmatpush2.bf16.msra.mxu0 0
    %761 = vmatprep.subr.bf16.mxu0 0
    %762 = vmatpush2.bf16.msra.mxu0 0
    %763 = vmatprep.subr.bf16.mxu0 0
    %764 = vmatpush2.bf16.msra.mxu0 0
    %765 = vmatprep.subr.bf16.mxu0 0
    %766 = vmatpush2.bf16.msra.mxu0 0
    %767 = vmatprep.subr.bf16.mxu0 0
    %768 = vmatpush2.bf16.msra.mxu0 0
    %769 = vmatprep.mubr.bf16.mxu0 0
    %770 = vmatmul.mubr.bf16.gmra.mxu0 %v732
    %v771 = vpop.f32.mrf.mxu0
    %v772 = vadd.f32 %v729, %v771
    %v773 = vpop.f32.mrf.mxu0
    %v774 = vpop.f32.mrf.mxu0
    %v775 = vadd.f32 %v729, %v774
    %v776 = vpop.f32.mrf.mxu0
    %777 = vmatprep.mubr.bf16.mxu0 0
    %778 = vmatmul.mubr.bf16.gmra.mxu0 %v735
    %v779 = vpop.f32.mrf.mxu0
    %v780 = vadd.f32 %v729, %v779
    %v781 = vpop.f32.mrf.mxu0
    %v782 = vpop.f32.mrf.mxu0
    %v783 = vadd.f32 %v729, %v782
    %v784 = vpop.f32.mrf.mxu0
    %785 = vdwg.mxu0
    %v786 = vmul.f32 %v772, 0.35355338
    %v787 = vmul.f32 %v775, 0.35355338
    %v788 = vmul.f32 %v780, 0.35355338
    %v789 = vmul.f32 %v783, 0.35355338
    %v790 = vpack.c.bf16 %v787, %v786
    %v791 = vpack.c.bf16 %v789, %v788
    %v792 = vpack.c.bf16 %v775, %v772
    %v793 = vpack.c.bf16 %v783, %v780
    %795 = vrot.lane.b32.xlu0 %v792, 96
    %v796 = vpop.permute.xlu0 %795
    %vm797 = vcmask 64512
    %v799 = vsel %vm797, %v790, 0
    %v802 = vsel %vm797, %v796, 0
    %804 = vmatprep.subr.bf16.mxu0 0
    %805 = vmatpush1.bf16.xpose.msra.mxu0 0
    %806 = vmatprep.subr.bf16.mxu0 0
    %807 = vmatpush1.bf16.xpose.msra.mxu0 0
    %808 = vmatprep.subr.bf16.mxu0 0
    %809 = vmatpush1.bf16.xpose.msra.mxu0 0
    %810 = vmatprep.subr.bf16.mxu0 0
    %811 = vmatpush1.bf16.xpose.msra.mxu0 0
    %812 = vmatprep.subr.bf16.mxu0 0
    %813 = vmatpush1.bf16.xpose.msra.mxu0 0
    %814 = vmatprep.subr.bf16.mxu0 0
    %815 = vmatpush1.bf16.xpose.msra.mxu0 0
    %816 = vmatprep.subr.bf16.mxu0 0
    %817 = vmatpush1.bf16.xpose.msra.mxu0 0
    %818 = vmatprep.subr.bf16.mxu0 0
    %819 = vmatpush1.bf16.xpose.msra.mxu0 %v802
    %820 = vmatprep.subr.bf16.mxu0 0
    %821 = vmatpush2.bf16.xpose.msra.mxu0 0
    %822 = vmatprep.subr.bf16.mxu0 0
    %823 = vmatpush2.bf16.xpose.msra.mxu0 0
    %824 = vmatprep.subr.bf16.mxu0 0
    %825 = vmatpush2.bf16.xpose.msra.mxu0 0
    %826 = vmatprep.subr.bf16.mxu0 0
    %827 = vmatpush2.bf16.xpose.msra.mxu0 0
    %828 = vmatprep.subr.bf16.mxu0 0
    %829 = vmatpush2.bf16.xpose.msra.mxu0 0
    %830 = vmatprep.subr.bf16.mxu0 0
    %831 = vmatpush2.bf16.xpose.msra.mxu0 0
    %832 = vmatprep.subr.bf16.mxu0 0
    %833 = vmatpush2.bf16.xpose.msra.mxu0 0
    %834 = vmatprep.subr.bf16.mxu0 0
    %835 = vmatpush2.bf16.xpose.msra.mxu0 0
    %836 = vmatprep.mubr.bf16.mxu0 0
    %837 = vmatmul.mubr.bf16.gmra.mxu0 %v799
    %v838 = vpop.f32.mrf.mxu0
    %v839 = vadd.f32 0.0, %v838
    %v840 = vpop.f32.mrf.mxu0
    %v841 = vpop.f32.mrf.mxu0
    %v842 = vadd.f32 0.0, %v841
    %v843 = vpop.f32.mrf.mxu0
    %844 = vdwg.mxu0
    %846 = vrot.lane.b32.xlu0 %v793, 96
    %v847 = vpop.permute.xlu0 %846
    %v849 = vsel %vm797, %v791, 0
    %v852 = vsel %vm797, %v847, 0
    %854 = vmatprep.subr.bf16.mxu0 0
    %855 = vmatpush1.bf16.xpose.msra.mxu0 0
    %856 = vmatprep.subr.bf16.mxu0 0
    %857 = vmatpush1.bf16.xpose.msra.mxu0 0
    %858 = vmatprep.subr.bf16.mxu0 0
    %859 = vmatpush1.bf16.xpose.msra.mxu0 0
    %860 = vmatprep.subr.bf16.mxu0 0
    %861 = vmatpush1.bf16.xpose.msra.mxu0 0
    %862 = vmatprep.subr.bf16.mxu0 0
    %863 = vmatpush1.bf16.xpose.msra.mxu0 0
    %864 = vmatprep.subr.bf16.mxu0 0
    %865 = vmatpush1.bf16.xpose.msra.mxu0 0
    %866 = vmatprep.subr.bf16.mxu0 0
    %867 = vmatpush1.bf16.xpose.msra.mxu0 0
    %868 = vmatprep.subr.bf16.mxu0 0
    %869 = vmatpush1.bf16.xpose.msra.mxu0 %v852
    %870 = vmatprep.subr.bf16.mxu0 0
    %871 = vmatpush2.bf16.xpose.msra.mxu0 0
    %872 = vmatprep.subr.bf16.mxu0 0
    %873 = vmatpush2.bf16.xpose.msra.mxu0 0
    %874 = vmatprep.subr.bf16.mxu0 0
    %875 = vmatpush2.bf16.xpose.msra.mxu0 0
    %876 = vmatprep.subr.bf16.mxu0 0
    %877 = vmatpush2.bf16.xpose.msra.mxu0 0
    %878 = vmatprep.subr.bf16.mxu0 0
    %879 = vmatpush2.bf16.xpose.msra.mxu0 0
    %880 = vmatprep.subr.bf16.mxu0 0
    %881 = vmatpush2.bf16.xpose.msra.mxu0 0
    %882 = vmatprep.subr.bf16.mxu0 0
    %883 = vmatpush2.bf16.xpose.msra.mxu0 0
    %884 = vmatprep.subr.bf16.mxu0 0
    %885 = vmatpush2.bf16.xpose.msra.mxu0 0
    %886 = vmatprep.mubr.bf16.mxu0 0
    %887 = vmatmul.mubr.bf16.gmra.mxu0 %v849
    %v888 = vpop.f32.mrf.mxu0
    %v889 = vadd.f32 0.0, %v888
    %v890 = vpop.f32.mrf.mxu0
    %v891 = vpop.f32.mrf.mxu0
    %v892 = vadd.f32 0.0, %v891
    %v893 = vpop.f32.mrf.mxu0
    %894 = vdwg.mxu0
    %vm895 = vcmask 130048
    %v896 = vsel %vm895, %v839, -inf
    %897 = vmax.xlane.f32.xlu0 %v896
    %v898 = vpop.xlane.xlu0 %897
    %v899 = vsel %vm895, %v842, -inf
    %900 = vmax.xlane.f32.xlu0 %v899
    %v901 = vpop.xlane.xlu0 %900
    %v902 = vsel %vm895, %v889, -inf
    %903 = vmax.xlane.f32.xlu0 %v902
    %v904 = vpop.xlane.xlu0 %903
    %v905 = vsel %vm895, %v892, -inf
    %906 = vmax.xlane.f32.xlu0 %v905
    %v907 = vpop.xlane.xlu0 %906
    %v908 = vsub.f32 %v839, %v898
    %v909 = vsub.f32 %v842, %v901
    %v910 = vsub.f32 %v889, %v904
    %v911 = vsub.f32 %v892, %v907
    %v912 = vmul.f32 %v908, 1.442695
    %v913 = vpow.pop %v912
    %v914 = vmul.f32 %v909, 1.442695
    %v915 = vpow.pop %v914
    %v916 = vmul.f32 %v910, 1.442695
    %v917 = vpow.pop %v916
    %v918 = vmul.f32 %v911, 1.442695
    %v919 = vpow.pop %v918
    %v920 = vsel %vm895, %v913, 0.0
    %921 = vadd.xlane.f32.xlu0 %v920
    %v922 = vpop.xlane.xlu0 %921
    %v923 = vsel %vm895, %v915, 0.0
    %924 = vadd.xlane.f32.xlu0 %v923
    %v925 = vpop.xlane.xlu0 %924
    %v926 = vsel %vm895, %v917, 0.0
    %927 = vadd.xlane.f32.xlu0 %v926
    %v928 = vpop.xlane.xlu0 %927
    %v929 = vsel %vm895, %v919, 0.0
    %930 = vadd.xlane.f32.xlu0 %v929
    %v931 = vpop.xlane.xlu0 %930
    %v932 = vrcp.pop %v922
    %v933 = vrcp.pop %v925
    %v934 = vrcp.pop %v928
    %v935 = vrcp.pop %v931
    %v936 = vmul.f32 %v913, %v932
    %v937 = vmul.f32 %v915, %v933
    %v938 = vmul.f32 %v917, %v934
    %v939 = vmul.f32 %v919, %v935
    %v940 = vpack.c.bf16 %v937, %v936
    %v941 = vpack.c.bf16 %v939, %v938
    %942 = vrot.lane.b32.xlu0 %v792, 64
    %v943 = vpop.permute.xlu0 %942
    %v946 = vsel %vm895, %v940, 0
    %948 = vmatprep.subr.bf16.mxu0 0
    %949 = vmatpush1.bf16.msra.mxu0 0
    %950 = vmatprep.subr.bf16.mxu0 0
    %951 = vmatpush1.bf16.msra.mxu0 0
    %952 = vmatprep.subr.bf16.mxu0 0
    %953 = vmatpush1.bf16.msra.mxu0 0
    %954 = vmatprep.subr.bf16.mxu0 0
    %955 = vmatpush1.bf16.msra.mxu0 0
    %956 = vmatprep.subr.bf16.mxu0 0
    %957 = vmatpush1.bf16.msra.mxu0 0
    %958 = vmatprep.subr.bf16.mxu0 0
    %959 = vmatpush1.bf16.msra.mxu0 0
    %960 = vmatprep.subr.bf16.mxu0 0
    %961 = vmatpush1.bf16.msra.mxu0 0
    %962 = vmatprep.subr.bf16.mxu0 0
    %963 = vmatpush1.bf16.msra.mxu0 %v943
    %964 = vmatprep.subr.bf16.mxu0 0
    %965 = vmatpush2.bf16.msra.mxu0 0
    %966 = vmatprep.subr.bf16.mxu0 0
    %967 = vmatpush2.bf16.msra.mxu0 0
    %968 = vmatprep.subr.bf16.mxu0 0
    %969 = vmatpush2.bf16.msra.mxu0 0
    %970 = vmatprep.subr.bf16.mxu0 0
    %971 = vmatpush2.bf16.msra.mxu0 0
    %972 = vmatprep.subr.bf16.mxu0 0
    %973 = vmatpush2.bf16.msra.mxu0 0
    %974 = vmatprep.subr.bf16.mxu0 0
    %975 = vmatpush2.bf16.msra.mxu0 0
    %976 = vmatprep.subr.bf16.mxu0 0
    %977 = vmatpush2.bf16.msra.mxu0 0
    %978 = vmatprep.subr.bf16.mxu0 0
    %979 = vmatpush2.bf16.msra.mxu0 0
    %980 = vmatprep.mubr.bf16.mxu0 0
    %981 = vmatmul.mubr.bf16.gmra.mxu0 %v946
    %v982 = vpop.f32.mrf.mxu0
    %v983 = vadd.f32 0.0, %v982
    %v984 = vpop.f32.mrf.mxu0
    %v985 = vpop.f32.mrf.mxu0
    %v986 = vadd.f32 0.0, %v985
    %v987 = vpop.f32.mrf.mxu0
    %988 = vdwg.mxu0
    %989 = vrot.lane.b32.xlu0 %v793, 64
    %v990 = vpop.permute.xlu0 %989
    %v993 = vsel %vm895, %v941, 0
    %995 = vmatprep.subr.bf16.mxu0 0
    %996 = vmatpush1.bf16.msra.mxu0 0
    %997 = vmatprep.subr.bf16.mxu0 0
    %998 = vmatpush1.bf16.msra.mxu0 0
    %999 = vmatprep.subr.bf16.mxu0 0
    %1000 = vmatpush1.bf16.msra.mxu0 0
    %1001 = vmatprep.subr.bf16.mxu0 0
    %1002 = vmatpush1.bf16.msra.mxu0 0
    %1003 = vmatprep.subr.bf16.mxu0 0
    %1004 = vmatpush1.bf16.msra.mxu0 0
    %1005 = vmatprep.subr.bf16.mxu0 0
    %1006 = vmatpush1.bf16.msra.mxu0 0
    %1007 = vmatprep.subr.bf16.mxu0 0
    %1008 = vmatpush1.bf16.msra.mxu0 0
    %1009 = vmatprep.subr.bf16.mxu0 0
    %1010 = vmatpush1.bf16.msra.mxu0 %v990
    %1011 = vmatprep.subr.bf16.mxu0 0
    %1012 = vmatpush2.bf16.msra.mxu0 0
    %1013 = vmatprep.subr.bf16.mxu0 0
    %1014 = vmatpush2.bf16.msra.mxu0 0
    %1015 = vmatprep.subr.bf16.mxu0 0
    %1016 = vmatpush2.bf16.msra.mxu0 0
    %1017 = vmatprep.subr.bf16.mxu0 0
    %1018 = vmatpush2.bf16.msra.mxu0 0
    %1019 = vmatprep.subr.bf16.mxu0 0
    %1020 = vmatpush2.bf16.msra.mxu0 0
    %1021 = vmatprep.subr.bf16.mxu0 0
    %1022 = vmatpush2.bf16.msra.mxu0 0
    %1023 = vmatprep.subr.bf16.mxu0 0
    %1024 = vmatpush2.bf16.msra.mxu0 0
    %1025 = vmatprep.subr.bf16.mxu0 0
    %1026 = vmatpush2.bf16.msra.mxu0 0
    %1027 = vmatprep.mubr.bf16.mxu0 0
    %1028 = vmatmul.mubr.bf16.gmra.mxu0 %v993
    %v1029 = vpop.f32.mrf.mxu0
    %v1030 = vadd.f32 0.0, %v1029
    %v1031 = vpop.f32.mrf.mxu0
    %v1032 = vpop.f32.mrf.mxu0
    %v1033 = vadd.f32 0.0, %v1032
    %v1034 = vpop.f32.mrf.mxu0
    %1035 = vdwg.mxu0
    %1037 = vrot.lane.b32.xlu0 %v790, 120
    %v1038 = vpop.permute.xlu0 %1037
    %1039 = vrot.lane.b32.xlu0 %v792, 88
    %v1040 = vpop.permute.xlu0 %1039
    %v1042 = vsel %vm797, %v1038, 0
    %v1045 = vsel %vm797, %v1040, 0
    %1047 = vmatprep.subr.bf16.mxu0 0
    %1048 = vmatpush1.bf16.xpose.msra.mxu0 0
    %1049 = vmatprep.subr.bf16.mxu0 0
    %1050 = vmatpush1.bf16.xpose.msra.mxu0 0
    %1051 = vmatprep.subr.bf16.mxu0 0
    %1052 = vmatpush1.bf16.xpose.msra.mxu0 0
    %1053 = vmatprep.subr.bf16.mxu0 0
    %1054 = vmatpush1.bf16.xpose.msra.mxu0 0
    %1055 = vmatprep.subr.bf16.mxu0 0
    %1056 = vmatpush1.bf16.xpose.msra.mxu0 0
    %1057 = vmatprep.subr.bf16.mxu0 0
    %1058 = vmatpush1.bf16.xpose.msra.mxu0 0
    %1059 = vmatprep.subr.bf16.mxu0 0
    %1060 = vmatpush1.bf16.xpose.msra.mxu0 0
    %1061 = vmatprep.subr.bf16.mxu0 0
    %1062 = vmatpush1.bf16.xpose.msra.mxu0 %v1045
    %1063 = vmatprep.subr.bf16.mxu0 0
    %1064 = vmatpush2.bf16.xpose.msra.mxu0 0
    %1065 = vmatprep.subr.bf16.mxu0 0
    %1066 = vmatpush2.bf16.xpose.msra.mxu0 0
    %1067 = vmatprep.subr.bf16.mxu0 0
    %1068 = vmatpush2.bf16.xpose.msra.mxu0 0
    %1069 = vmatprep.subr.bf16.mxu0 0
    %1070 = vmatpush2.bf16.xpose.msra.mxu0 0
    %1071 = vmatprep.subr.bf16.mxu0 0
    %1072 = vmatpush2.bf16.xpose.msra.mxu0 0
    %1073 = vmatprep.subr.bf16.mxu0 0
    %1074 = vmatpush2.bf16.xpose.msra.mxu0 0
    %1075 = vmatprep.subr.bf16.mxu0 0
    %1076 = vmatpush2.bf16.xpose.msra.mxu0 0
    %1077 = vmatprep.subr.bf16.mxu0 0
    %1078 = vmatpush2.bf16.xpose.msra.mxu0 0
    %1079 = vmatprep.mubr.bf16.mxu0 0
    %1080 = vmatmul.mubr.bf16.gmra.mxu0 %v1042
    %v1081 = vpop.f32.mrf.mxu0
    %v1082 = vadd.f32 0.0, %v1081
    %v1083 = vpop.f32.mrf.mxu0
    %v1084 = vpop.f32.mrf.mxu0
    %v1085 = vadd.f32 0.0, %v1084
    %v1086 = vpop.f32.mrf.mxu0
    %1087 = vdwg.mxu0
    %1089 = vrot.lane.b32.xlu0 %v791, 120
    %v1090 = vpop.permute.xlu0 %1089
    %1091 = vrot.lane.b32.xlu0 %v793, 88
    %v1092 = vpop.permute.xlu0 %1091
    %v1094 = vsel %vm797, %v1090, 0
    %v1097 = vsel %vm797, %v1092, 0
    %1099 = vmatprep.subr.bf16.mxu0 0
    %1100 = vmatpush1.bf16.xpose.msra.mxu0 0
    %1101 = vmatprep.subr.bf16.mxu0 0
    %1102 = vmatpush1.bf16.xpose.msra.mxu0 0
    %1103 = vmatprep.subr.bf16.mxu0 0
    %1104 = vmatpush1.bf16.xpose.msra.mxu0 0
    %1105 = vmatprep.subr.bf16.mxu0 0
    %1106 = vmatpush1.bf16.xpose.msra.mxu0 0
    %1107 = vmatprep.subr.bf16.mxu0 0
    %1108 = vmatpush1.bf16.xpose.msra.mxu0 0
    %1109 = vmatprep.subr.bf16.mxu0 0
    %1110 = vmatpush1.bf16.xpose.msra.mxu0 0
    %1111 = vmatprep.subr.bf16.mxu0 0
    %1112 = vmatpush1.bf16.xpose.msra.mxu0 0
    %1113 = vmatprep.subr.bf16.mxu0 0
    %1114 = vmatpush1.bf16.xpose.msra.mxu0 %v1097
    %1115 = vmatprep.subr.bf16.mxu0 0
    %1116 = vmatpush2.bf16.xpose.msra.mxu0 0
    %1117 = vmatprep.subr.bf16.mxu0 0
    %1118 = vmatpush2.bf16.xpose.msra.mxu0 0
    %1119 = vmatprep.subr.bf16.mxu0 0
    %1120 = vmatpush2.bf16.xpose.msra.mxu0 0
    %1121 = vmatprep.subr.bf16.mxu0 0
    %1122 = vmatpush2.bf16.xpose.msra.mxu0 0
    %1123 = vmatprep.subr.bf16.mxu0 0
    %1124 = vmatpush2.bf16.xpose.msra.mxu0 0
    %1125 = vmatprep.subr.bf16.mxu0 0
    %1126 = vmatpush2.bf16.xpose.msra.mxu0 0
    %1127 = vmatprep.subr.bf16.mxu0 0
    %1128 = vmatpush2.bf16.xpose.msra.mxu0 0
    %1129 = vmatprep.subr.bf16.mxu0 0
    %1130 = vmatpush2.bf16.xpose.msra.mxu0 0
    %1131 = vmatprep.mubr.bf16.mxu0 0
    %1132 = vmatmul.mubr.bf16.gmra.mxu0 %v1094
    %v1133 = vpop.f32.mrf.mxu0
    %v1134 = vadd.f32 0.0, %v1133
    %v1135 = vpop.f32.mrf.mxu0
    %v1136 = vpop.f32.mrf.mxu0
    %v1137 = vadd.f32 0.0, %v1136
    %v1138 = vpop.f32.mrf.mxu0
    %1139 = vdwg.mxu0
    %v1140 = vsel %vm895, %v1082, -inf
    %1141 = vmax.xlane.f32.xlu0 %v1140
    %v1142 = vpop.xlane.xlu0 %1141
    %v1143 = vsel %vm895, %v1085, -inf
    %1144 = vmax.xlane.f32.xlu0 %v1143
    %v1145 = vpop.xlane.xlu0 %1144
    %v1146 = vsel %vm895, %v1134, -inf
    %1147 = vmax.xlane.f32.xlu0 %v1146
    %v1148 = vpop.xlane.xlu0 %1147
    %v1149 = vsel %vm895, %v1137, -inf
    %1150 = vmax.xlane.f32.xlu0 %v1149
    %v1151 = vpop.xlane.xlu0 %1150
    %v1152 = vsub.f32 %v1082, %v1142
    %v1153 = vsub.f32 %v1085, %v1145
    %v1154 = vsub.f32 %v1134, %v1148
    %v1155 = vsub.f32 %v1137, %v1151
    %v1156 = vmul.f32 %v1152, 1.442695
    %v1157 = vpow.pop %v1156
    %v1158 = vmul.f32 %v1153, 1.442695
    %v1159 = vpow.pop %v1158
    %v1160 = vmul.f32 %v1154, 1.442695
    %v1161 = vpow.pop %v1160
    %v1162 = vmul.f32 %v1155, 1.442695
    %v1163 = vpow.pop %v1162
    %v1164 = vsel %vm895, %v1157, 0.0
    %1165 = vadd.xlane.f32.xlu0 %v1164
    %v1166 = vpop.xlane.xlu0 %1165
    %v1167 = vsel %vm895, %v1159, 0.0
    %1168 = vadd.xlane.f32.xlu0 %v1167
    %v1169 = vpop.xlane.xlu0 %1168
    %v1170 = vsel %vm895, %v1161, 0.0
    %1171 = vadd.xlane.f32.xlu0 %v1170
    %v1172 = vpop.xlane.xlu0 %1171
    %v1173 = vsel %vm895, %v1163, 0.0
    %1174 = vadd.xlane.f32.xlu0 %v1173
    %v1175 = vpop.xlane.xlu0 %1174
    %v1176 = vrcp.pop %v1166
    %v1177 = vrcp.pop %v1169
    %v1178 = vrcp.pop %v1172
    %v1179 = vrcp.pop %v1175
    %v1180 = vmul.f32 %v1157, %v1176
    %v1181 = vmul.f32 %v1159, %v1177
    %v1182 = vmul.f32 %v1161, %v1178
    %v1183 = vmul.f32 %v1163, %v1179
    %v1184 = vpack.c.bf16 %v1181, %v1180
    %v1185 = vpack.c.bf16 %v1183, %v1182
    %1186 = vrot.lane.b32.xlu0 %v792, 56
    %v1187 = vpop.permute.xlu0 %1186
    %v1190 = vsel %vm895, %v1184, 0
    %1192 = vmatprep.subr.bf16.mxu0 0
    %1193 = vmatpush1.bf16.msra.mxu0 0
    %1194 = vmatprep.subr.bf16.mxu0 0
    %1195 = vmatpush1.bf16.msra.mxu0 0
    %1196 = vmatprep.subr.bf16.mxu0 0
    %1197 = vmatpush1.bf16.msra.mxu0 0
    %1198 = vmatprep.subr.bf16.mxu0 0
    %1199 = vmatpush1.bf16.msra.mxu0 0
    %1200 = vmatprep.subr.bf16.mxu0 0
    %1201 = vmatpush1.bf16.msra.mxu0 0
    %1202 = vmatprep.subr.bf16.mxu0 0
    %1203 = vmatpush1.bf16.msra.mxu0 0
    %1204 = vmatprep.subr.bf16.mxu0 0
    %1205 = vmatpush1.bf16.msra.mxu0 0
    %1206 = vmatprep.subr.bf16.mxu0 0
    %1207 = vmatpush1.bf16.msra.mxu0 %v1187
    %1208 = vmatprep.subr.bf16.mxu0 0
    %1209 = vmatpush2.bf16.msra.mxu0 0
    %1210 = vmatprep.subr.bf16.mxu0 0
    %1211 = vmatpush2.bf16.msra.mxu0 0
    %1212 = vmatprep.subr.bf16.mxu0 0
    %1213 = vmatpush2.bf16.msra.mxu0 0
    %1214 = vmatprep.subr.bf16.mxu0 0
    %1215 = vmatpush2.bf16.msra.mxu0 0
    %1216 = vmatprep.subr.bf16.mxu0 0
    %1217 = vmatpush2.bf16.msra.mxu0 0
    %1218 = vmatprep.subr.bf16.mxu0 0
    %1219 = vmatpush2.bf16.msra.mxu0 0
    %1220 = vmatprep.subr.bf16.mxu0 0
    %1221 = vmatpush2.bf16.msra.mxu0 0
    %1222 = vmatprep.subr.bf16.mxu0 0
    %1223 = vmatpush2.bf16.msra.mxu0 0
    %1224 = vmatprep.mubr.bf16.mxu0 0
    %1225 = vmatmul.mubr.bf16.gmra.mxu0 %v1190
    %v1226 = vpop.f32.mrf.mxu0
    %v1227 = vadd.f32 0.0, %v1226
    %v1228 = vpop.f32.mrf.mxu0
    %v1229 = vpop.f32.mrf.mxu0
    %v1230 = vadd.f32 0.0, %v1229
    %v1231 = vpop.f32.mrf.mxu0
    %1232 = vdwg.mxu0
    %1233 = vrot.lane.b32.xlu0 %v793, 56
    %v1234 = vpop.permute.xlu0 %1233
    %v1237 = vsel %vm895, %v1185, 0
    %1239 = vmatprep.subr.bf16.mxu0 0
    %1240 = vmatpush1.bf16.msra.mxu0 0
    %1241 = vmatprep.subr.bf16.mxu0 0
    %1242 = vmatpush1.bf16.msra.mxu0 0
    %1243 = vmatprep.subr.bf16.mxu0 0
    %1244 = vmatpush1.bf16.msra.mxu0 0
    %1245 = vmatprep.subr.bf16.mxu0 0
    %1246 = vmatpush1.bf16.msra.mxu0 0
    %1247 = vmatprep.subr.bf16.mxu0 0
    %1248 = vmatpush1.bf16.msra.mxu0 0
    %1249 = vmatprep.subr.bf16.mxu0 0
    %1250 = vmatpush1.bf16.msra.mxu0 0
    %1251 = vmatprep.subr.bf16.mxu0 0
    %1252 = vmatpush1.bf16.msra.mxu0 0
    %1253 = vmatprep.subr.bf16.mxu0 0
    %1254 = vmatpush1.bf16.msra.mxu0 %v1234
    %1255 = vmatprep.subr.bf16.mxu0 0
    %1256 = vmatpush2.bf16.msra.mxu0 0
    %1257 = vmatprep.subr.bf16.mxu0 0
    %1258 = vmatpush2.bf16.msra.mxu0 0
    %1259 = vmatprep.subr.bf16.mxu0 0
    %1260 = vmatpush2.bf16.msra.mxu0 0
    %1261 = vmatprep.subr.bf16.mxu0 0
    %1262 = vmatpush2.bf16.msra.mxu0 0
    %1263 = vmatprep.subr.bf16.mxu0 0
    %1264 = vmatpush2.bf16.msra.mxu0 0
    %1265 = vmatprep.subr.bf16.mxu0 0
    %1266 = vmatpush2.bf16.msra.mxu0 0
    %1267 = vmatprep.subr.bf16.mxu0 0
    %1268 = vmatpush2.bf16.msra.mxu0 0
    %1269 = vmatprep.subr.bf16.mxu0 0
    %1270 = vmatpush2.bf16.msra.mxu0 0
    %1271 = vmatprep.mubr.bf16.mxu0 0
    %1272 = vmatmul.mubr.bf16.gmra.mxu0 %v1237
    %v1273 = vpop.f32.mrf.mxu0
    %v1274 = vadd.f32 0.0, %v1273
    %v1275 = vpop.f32.mrf.mxu0
    %v1276 = vpop.f32.mrf.mxu0
    %v1277 = vadd.f32 0.0, %v1276
    %v1278 = vpop.f32.mrf.mxu0
    %1279 = vdwg.mxu0
    %1280 = vrot.lane.b32.xlu0 %v790, 112
    %v1281 = vpop.permute.xlu0 %1280
    %1282 = vrot.lane.b32.xlu0 %v792, 80
    %v1283 = vpop.permute.xlu0 %1282
    %v1285 = vsel %vm797, %v1281, 0
    %v1288 = vsel %vm797, %v1283, 0
    %1290 = vmatprep.subr.bf16.mxu0 0
    %1291 = vmatpush1.bf16.xpose.msra.mxu0 0
    %1292 = vmatprep.subr.bf16.mxu0 0
    %1293 = vmatpush1.bf16.xpose.msra.mxu0 0
    %1294 = vmatprep.subr.bf16.mxu0 0
    %1295 = vmatpush1.bf16.xpose.msra.mxu0 0
    %1296 = vmatprep.subr.bf16.mxu0 0
    %1297 = vmatpush1.bf16.xpose.msra.mxu0 0
    %1298 = vmatprep.subr.bf16.mxu0 0
    %1299 = vmatpush1.bf16.xpose.msra.mxu0 0
    %1300 = vmatprep.subr.bf16.mxu0 0
    %1301 = vmatpush1.bf16.xpose.msra.mxu0 0
    %1302 = vmatprep.subr.bf16.mxu0 0
    %1303 = vmatpush1.bf16.xpose.msra.mxu0 0
    %1304 = vmatprep.subr.bf16.mxu0 0
    %1305 = vmatpush1.bf16.xpose.msra.mxu0 %v1288
    %1306 = vmatprep.subr.bf16.mxu0 0
    %1307 = vmatpush2.bf16.xpose.msra.mxu0 0
    %1308 = vmatprep.subr.bf16.mxu0 0
    %1309 = vmatpush2.bf16.xpose.msra.mxu0 0
    %1310 = vmatprep.subr.bf16.mxu0 0
    %1311 = vmatpush2.bf16.xpose.msra.mxu0 0
    %1312 = vmatprep.subr.bf16.mxu0 0
    %1313 = vmatpush2.bf16.xpose.msra.mxu0 0
    %1314 = vmatprep.subr.bf16.mxu0 0
    %1315 = vmatpush2.bf16.xpose.msra.mxu0 0
    %1316 = vmatprep.subr.bf16.mxu0 0
    %1317 = vmatpush2.bf16.xpose.msra.mxu0 0
    %1318 = vmatprep.subr.bf16.mxu0 0
    %1319 = vmatpush2.bf16.xpose.msra.mxu0 0
    %1320 = vmatprep.subr.bf16.mxu0 0
    %1321 = vmatpush2.bf16.xpose.msra.mxu0 0
    %1322 = vmatprep.mubr.bf16.mxu0 0
    %1323 = vmatmul.mubr.bf16.gmra.mxu0 %v1285
    %v1324 = vpop.f32.mrf.mxu0
    %v1325 = vadd.f32 0.0, %v1324
    %v1326 = vpop.f32.mrf.mxu0
    %v1327 = vpop.f32.mrf.mxu0
    %v1328 = vadd.f32 0.0, %v1327
    %v1329 = vpop.f32.mrf.mxu0
    %1330 = vdwg.mxu0
    %1331 = vrot.lane.b32.xlu0 %v791, 112
    %v1332 = vpop.permute.xlu0 %1331
    %1333 = vrot.lane.b32.xlu0 %v793, 80
    %v1334 = vpop.permute.xlu0 %1333
    %v1336 = vsel %vm797, %v1332, 0
    %v1339 = vsel %vm797, %v1334, 0
    %1341 = vmatprep.subr.bf16.mxu0 0
    %1342 = vmatpush1.bf16.xpose.msra.mxu0 0
    %1343 = vmatprep.subr.bf16.mxu0 0
    %1344 = vmatpush1.bf16.xpose.msra.mxu0 0
    %1345 = vmatprep.subr.bf16.mxu0 0
    %1346 = vmatpush1.bf16.xpose.msra.mxu0 0
    %1347 = vmatprep.subr.bf16.mxu0 0
    %1348 = vmatpush1.bf16.xpose.msra.mxu0 0
    %1349 = vmatprep.subr.bf16.mxu0 0
    %1350 = vmatpush1.bf16.xpose.msra.mxu0 0
    %1351 = vmatprep.subr.bf16.mxu0 0
    %1352 = vmatpush1.bf16.xpose.msra.mxu0 0
    %1353 = vmatprep.subr.bf16.mxu0 0
    %1354 = vmatpush1.bf16.xpose.msra.mxu0 0
    %1355 = vmatprep.subr.bf16.mxu0 0
    %1356 = vmatpush1.bf16.xpose.msra.mxu0 %v1339
    %1357 = vmatprep.subr.bf16.mxu0 0
    %1358 = vmatpush2.bf16.xpose.msra.mxu0 0
    %1359 = vmatprep.subr.bf16.mxu0 0
    %1360 = vmatpush2.bf16.xpose.msra.mxu0 0
    %1361 = vmatprep.subr.bf16.mxu0 0
    %1362 = vmatpush2.bf16.xpose.msra.mxu0 0
    %1363 = vmatprep.subr.bf16.mxu0 0
    %1364 = vmatpush2.bf16.xpose.msra.mxu0 0
    %1365 = vmatprep.subr.bf16.mxu0 0
    %1366 = vmatpush2.bf16.xpose.msra.mxu0 0
    %1367 = vmatprep.subr.bf16.mxu0 0
    %1368 = vmatpush2.bf16.xpose.msra.mxu0 0
    %1369 = vmatprep.subr.bf16.mxu0 0
    %1370 = vmatpush2.bf16.xpose.msra.mxu0 0
    %1371 = vmatprep.subr.bf16.mxu0 0
    %1372 = vmatpush2.bf16.xpose.msra.mxu0 0
    %1373 = vmatprep.mubr.bf16.mxu0 0
    %1374 = vmatmul.mubr.bf16.gmra.mxu0 %v1336
    %v1375 = vpop.f32.mrf.mxu0
    %v1376 = vadd.f32 0.0, %v1375
    %v1377 = vpop.f32.mrf.mxu0
    %v1378 = vpop.f32.mrf.mxu0
    %v1379 = vadd.f32 0.0, %v1378
    %v1380 = vpop.f32.mrf.mxu0
    %1381 = vdwg.mxu0
    %v1382 = vsel %vm895, %v1325, -inf
    %1383 = vmax.xlane.f32.xlu0 %v1382
    %v1384 = vpop.xlane.xlu0 %1383
    %v1385 = vsel %vm895, %v1328, -inf
    %1386 = vmax.xlane.f32.xlu0 %v1385
    %v1387 = vpop.xlane.xlu0 %1386
    %v1388 = vsel %vm895, %v1376, -inf
    %1389 = vmax.xlane.f32.xlu0 %v1388
    %v1390 = vpop.xlane.xlu0 %1389
    %v1391 = vsel %vm895, %v1379, -inf
    %1392 = vmax.xlane.f32.xlu0 %v1391
    %v1393 = vpop.xlane.xlu0 %1392
    %v1394 = vsub.f32 %v1325, %v1384
    %v1395 = vsub.f32 %v1328, %v1387
    %v1396 = vsub.f32 %v1376, %v1390
    %v1397 = vsub.f32 %v1379, %v1393
    %v1398 = vmul.f32 %v1394, 1.442695
    %v1399 = vpow.pop %v1398
    %v1400 = vmul.f32 %v1395, 1.442695
    %v1401 = vpow.pop %v1400
    %v1402 = vmul.f32 %v1396, 1.442695
    %v1403 = vpow.pop %v1402
    %v1404 = vmul.f32 %v1397, 1.442695
    %v1405 = vpow.pop %v1404
    %v1406 = vsel %vm895, %v1399, 0.0
    %1407 = vadd.xlane.f32.xlu0 %v1406
    %v1408 = vpop.xlane.xlu0 %1407
    %v1409 = vsel %vm895, %v1401, 0.0
    %1410 = vadd.xlane.f32.xlu0 %v1409
    %v1411 = vpop.xlane.xlu0 %1410
    %v1412 = vsel %vm895, %v1403, 0.0
    %1413 = vadd.xlane.f32.xlu0 %v1412
    %v1414 = vpop.xlane.xlu0 %1413
    %v1415 = vsel %vm895, %v1405, 0.0
    %1416 = vadd.xlane.f32.xlu0 %v1415
    %v1417 = vpop.xlane.xlu0 %1416
    %v1418 = vrcp.pop %v1408
    %v1419 = vrcp.pop %v1411
    %v1420 = vrcp.pop %v1414
    %v1421 = vrcp.pop %v1417
    %v1422 = vmul.f32 %v1399, %v1418
    %v1423 = vmul.f32 %v1401, %v1419
    %v1424 = vmul.f32 %v1403, %v1420
    %v1425 = vmul.f32 %v1405, %v1421
    %v1426 = vpack.c.bf16 %v1423, %v1422
    %v1427 = vpack.c.bf16 %v1425, %v1424
    %1428 = vrot.lane.b32.xlu0 %v792, 48
    %v1429 = vpop.permute.xlu0 %1428
    %v1432 = vsel %vm895, %v1426, 0
    %1434 = vmatprep.subr.bf16.mxu0 0
    %1435 = vmatpush1.bf16.msra.mxu0 0
    %1436 = vmatprep.subr.bf16.mxu0 0
    %1437 = vmatpush1.bf16.msra.mxu0 0
    %1438 = vmatprep.subr.bf16.mxu0 0
    %1439 = vmatpush1.bf16.msra.mxu0 0
    %1440 = vmatprep.subr.bf16.mxu0 0
    %1441 = vmatpush1.bf16.msra.mxu0 0
    %1442 = vmatprep.subr.bf16.mxu0 0
    %1443 = vmatpush1.bf16.msra.mxu0 0
    %1444 = vmatprep.subr.bf16.mxu0 0
    %1445 = vmatpush1.bf16.msra.mxu0 0
    %1446 = vmatprep.subr.bf16.mxu0 0
    %1447 = vmatpush1.bf16.msra.mxu0 0
    %1448 = vmatprep.subr.bf16.mxu0 0
    %1449 = vmatpush1.bf16.msra.mxu0 %v1429
    %1450 = vmatprep.subr.bf16.mxu0 0
    %1451 = vmatpush2.bf16.msra.mxu0 0
    %1452 = vmatprep.subr.bf16.mxu0 0
    %1453 = vmatpush2.bf16.msra.mxu0 0
    %1454 = vmatprep.subr.bf16.mxu0 0
    %1455 = vmatpush2.bf16.msra.mxu0 0
    %1456 = vmatprep.subr.bf16.mxu0 0
    %1457 = vmatpush2.bf16.msra.mxu0 0
    %1458 = vmatprep.subr.bf16.mxu0 0
    %1459 = vmatpush2.bf16.msra.mxu0 0
    %1460 = vmatprep.subr.bf16.mxu0 0
    %1461 = vmatpush2.bf16.msra.mxu0 0
    %1462 = vmatprep.subr.bf16.mxu0 0
    %1463 = vmatpush2.bf16.msra.mxu0 0
    %1464 = vmatprep.subr.bf16.mxu0 0
    %1465 = vmatpush2.bf16.msra.mxu0 0
    %1466 = vmatprep.mubr.bf16.mxu0 0
    %1467 = vmatmul.mubr.bf16.gmra.mxu0 %v1432
    %v1468 = vpop.f32.mrf.mxu0
    %v1469 = vadd.f32 0.0, %v1468
    %v1470 = vpop.f32.mrf.mxu0
    %v1471 = vpop.f32.mrf.mxu0
    %v1472 = vadd.f32 0.0, %v1471
    %v1473 = vpop.f32.mrf.mxu0
    %1474 = vdwg.mxu0
    %1475 = vrot.lane.b32.xlu0 %v793, 48
    %v1476 = vpop.permute.xlu0 %1475
    %v1479 = vsel %vm895, %v1427, 0
    %1481 = vmatprep.subr.bf16.mxu0 0
    %1482 = vmatpush1.bf16.msra.mxu0 0
    %1483 = vmatprep.subr.bf16.mxu0 0
    %1484 = vmatpush1.bf16.msra.mxu0 0
    %1485 = vmatprep.subr.bf16.mxu0 0
    %1486 = vmatpush1.bf16.msra.mxu0 0
    %1487 = vmatprep.subr.bf16.mxu0 0
    %1488 = vmatpush1.bf16.msra.mxu0 0
    %1489 = vmatprep.subr.bf16.mxu0 0
    %1490 = vmatpush1.bf16.msra.mxu0 0
    %1491 = vmatprep.subr.bf16.mxu0 0
    %1492 = vmatpush1.bf16.msra.mxu0 0
    %1493 = vmatprep.subr.bf16.mxu0 0
    %1494 = vmatpush1.bf16.msra.mxu0 0
    %1495 = vmatprep.subr.bf16.mxu0 0
    %1496 = vmatpush1.bf16.msra.mxu0 %v1476
    %1497 = vmatprep.subr.bf16.mxu0 0
    %1498 = vmatpush2.bf16.msra.mxu0 0
    %1499 = vmatprep.subr.bf16.mxu0 0
    %1500 = vmatpush2.bf16.msra.mxu0 0
    %1501 = vmatprep.subr.bf16.mxu0 0
    %1502 = vmatpush2.bf16.msra.mxu0 0
    %1503 = vmatprep.subr.bf16.mxu0 0
    %1504 = vmatpush2.bf16.msra.mxu0 0
    %1505 = vmatprep.subr.bf16.mxu0 0
    %1506 = vmatpush2.bf16.msra.mxu0 0
    %1507 = vmatprep.subr.bf16.mxu0 0
    %1508 = vmatpush2.bf16.msra.mxu0 0
    %1509 = vmatprep.subr.bf16.mxu0 0
    %1510 = vmatpush2.bf16.msra.mxu0 0
    %1511 = vmatprep.subr.bf16.mxu0 0
    %1512 = vmatpush2.bf16.msra.mxu0 0
    %1513 = vmatprep.mubr.bf16.mxu0 0
    %1514 = vmatmul.mubr.bf16.gmra.mxu0 %v1479
    %v1515 = vpop.f32.mrf.mxu0
    %v1516 = vadd.f32 0.0, %v1515
    %v1517 = vpop.f32.mrf.mxu0
    %v1518 = vpop.f32.mrf.mxu0
    %v1519 = vadd.f32 0.0, %v1518
    %v1520 = vpop.f32.mrf.mxu0
    %1521 = vdwg.mxu0
    %1522 = vrot.lane.b32.xlu0 %v790, 104
    %v1523 = vpop.permute.xlu0 %1522
    %1524 = vrot.lane.b32.xlu0 %v792, 72
    %v1525 = vpop.permute.xlu0 %1524
    %v1527 = vsel %vm797, %v1523, 0
    %v1530 = vsel %vm797, %v1525, 0
    %1532 = vmatprep.subr.bf16.mxu0 0
    %1533 = vmatpush1.bf16.xpose.msra.mxu0 0
    %1534 = vmatprep.subr.bf16.mxu0 0
    %1535 = vmatpush1.bf16.xpose.msra.mxu0 0
    %1536 = vmatprep.subr.bf16.mxu0 0
    %1537 = vmatpush1.bf16.xpose.msra.mxu0 0
    %1538 = vmatprep.subr.bf16.mxu0 0
    %1539 = vmatpush1.bf16.xpose.msra.mxu0 0
    %1540 = vmatprep.subr.bf16.mxu0 0
    %1541 = vmatpush1.bf16.xpose.msra.mxu0 0
    %1542 = vmatprep.subr.bf16.mxu0 0
    %1543 = vmatpush1.bf16.xpose.msra.mxu0 0
    %1544 = vmatprep.subr.bf16.mxu0 0
    %1545 = vmatpush1.bf16.xpose.msra.mxu0 0
    %1546 = vmatprep.subr.bf16.mxu0 0
    %1547 = vmatpush1.bf16.xpose.msra.mxu0 %v1530
    %1548 = vmatprep.subr.bf16.mxu0 0
    %1549 = vmatpush2.bf16.xpose.msra.mxu0 0
    %1550 = vmatprep.subr.bf16.mxu0 0
    %1551 = vmatpush2.bf16.xpose.msra.mxu0 0
    %1552 = vmatprep.subr.bf16.mxu0 0
    %1553 = vmatpush2.bf16.xpose.msra.mxu0 0
    %1554 = vmatprep.subr.bf16.mxu0 0
    %1555 = vmatpush2.bf16.xpose.msra.mxu0 0
    %1556 = vmatprep.subr.bf16.mxu0 0
    %1557 = vmatpush2.bf16.xpose.msra.mxu0 0
    %1558 = vmatprep.subr.bf16.mxu0 0
    %1559 = vmatpush2.bf16.xpose.msra.mxu0 0
    %1560 = vmatprep.subr.bf16.mxu0 0
    %1561 = vmatpush2.bf16.xpose.msra.mxu0 0
    %1562 = vmatprep.subr.bf16.mxu0 0
    %1563 = vmatpush2.bf16.xpose.msra.mxu0 0
    %1564 = vmatprep.mubr.bf16.mxu0 0
    %1565 = vmatmul.mubr.bf16.gmra.mxu0 %v1527
    %v1566 = vpop.f32.mrf.mxu0
    %v1567 = vadd.f32 0.0, %v1566
    %v1568 = vpop.f32.mrf.mxu0
    %v1569 = vpop.f32.mrf.mxu0
    %v1570 = vadd.f32 0.0, %v1569
    %v1571 = vpop.f32.mrf.mxu0
    %1572 = vdwg.mxu0
    %1573 = vrot.lane.b32.xlu0 %v791, 104
    %v1574 = vpop.permute.xlu0 %1573
    %1575 = vrot.lane.b32.xlu0 %v793, 72
    %v1576 = vpop.permute.xlu0 %1575
    %v1578 = vsel %vm797, %v1574, 0
    %v1581 = vsel %vm797, %v1576, 0
    %1583 = vmatprep.subr.bf16.mxu0 0
    %1584 = vmatpush1.bf16.xpose.msra.mxu0 0
    %1585 = vmatprep.subr.bf16.mxu0 0
    %1586 = vmatpush1.bf16.xpose.msra.mxu0 0
    %1587 = vmatprep.subr.bf16.mxu0 0
    %1588 = vmatpush1.bf16.xpose.msra.mxu0 0
    %1589 = vmatprep.subr.bf16.mxu0 0
    %1590 = vmatpush1.bf16.xpose.msra.mxu0 0
    %1591 = vmatprep.subr.bf16.mxu0 0
    %1592 = vmatpush1.bf16.xpose.msra.mxu0 0
    %1593 = vmatprep.subr.bf16.mxu0 0
    %1594 = vmatpush1.bf16.xpose.msra.mxu0 0
    %1595 = vmatprep.subr.bf16.mxu0 0
    %1596 = vmatpush1.bf16.xpose.msra.mxu0 0
    %1597 = vmatprep.subr.bf16.mxu0 0
    %1598 = vmatpush1.bf16.xpose.msra.mxu0 %v1581
    %1599 = vmatprep.subr.bf16.mxu0 0
    %1600 = vmatpush2.bf16.xpose.msra.mxu0 0
    %1601 = vmatprep.subr.bf16.mxu0 0
    %1602 = vmatpush2.bf16.xpose.msra.mxu0 0
    %1603 = vmatprep.subr.bf16.mxu0 0
    %1604 = vmatpush2.bf16.xpose.msra.mxu0 0
    %1605 = vmatprep.subr.bf16.mxu0 0
    %1606 = vmatpush2.bf16.xpose.msra.mxu0 0
    %1607 = vmatprep.subr.bf16.mxu0 0
    %1608 = vmatpush2.bf16.xpose.msra.mxu0 0
    %1609 = vmatprep.subr.bf16.mxu0 0
    %1610 = vmatpush2.bf16.xpose.msra.mxu0 0
    %1611 = vmatprep.subr.bf16.mxu0 0
    %1612 = vmatpush2.bf16.xpose.msra.mxu0 0
    %1613 = vmatprep.subr.bf16.mxu0 0
    %1614 = vmatpush2.bf16.xpose.msra.mxu0 0
    %1615 = vmatprep.mubr.bf16.mxu0 0
    %1616 = vmatmul.mubr.bf16.gmra.mxu0 %v1578
    %v1617 = vpop.f32.mrf.mxu0
    %v1618 = vadd.f32 0.0, %v1617
    %v1619 = vpop.f32.mrf.mxu0
    %v1620 = vpop.f32.mrf.mxu0
    %v1621 = vadd.f32 0.0, %v1620
    %v1622 = vpop.f32.mrf.mxu0
    %1623 = vdwg.mxu0
    %v1624 = vsel %vm895, %v1567, -inf
    %1625 = vmax.xlane.f32.xlu0 %v1624
    %v1626 = vpop.xlane.xlu0 %1625
    %v1627 = vsel %vm895, %v1570, -inf
    %1628 = vmax.xlane.f32.xlu0 %v1627
    %v1629 = vpop.xlane.xlu0 %1628
    %v1630 = vsel %vm895, %v1618, -inf
    %1631 = vmax.xlane.f32.xlu0 %v1630
    %v1632 = vpop.xlane.xlu0 %1631
    %v1633 = vsel %vm895, %v1621, -inf
    %1634 = vmax.xlane.f32.xlu0 %v1633
    %v1635 = vpop.xlane.xlu0 %1634
    %v1636 = vsub.f32 %v1567, %v1626
    %v1637 = vsub.f32 %v1570, %v1629
    %v1638 = vsub.f32 %v1618, %v1632
    %v1639 = vsub.f32 %v1621, %v1635
    %v1640 = vmul.f32 %v1636, 1.442695
    %v1641 = vpow.pop %v1640
    %v1642 = vmul.f32 %v1637, 1.442695
    %v1643 = vpow.pop %v1642
    %v1644 = vmul.f32 %v1638, 1.442695
    %v1645 = vpow.pop %v1644
    %v1646 = vmul.f32 %v1639, 1.442695
    %v1647 = vpow.pop %v1646
    %v1648 = vsel %vm895, %v1641, 0.0
    %1649 = vadd.xlane.f32.xlu0 %v1648
    %v1650 = vpop.xlane.xlu0 %1649
    %v1651 = vsel %vm895, %v1643, 0.0
    %1652 = vadd.xlane.f32.xlu0 %v1651
    %v1653 = vpop.xlane.xlu0 %1652
    %v1654 = vsel %vm895, %v1645, 0.0
    %1655 = vadd.xlane.f32.xlu0 %v1654
    %v1656 = vpop.xlane.xlu0 %1655
    %v1657 = vsel %vm895, %v1647, 0.0
    %1658 = vadd.xlane.f32.xlu0 %v1657
    %v1659 = vpop.xlane.xlu0 %1658
    %v1660 = vrcp.pop %v1650
    %v1661 = vrcp.pop %v1653
    %v1662 = vrcp.pop %v1656
    %v1663 = vrcp.pop %v1659
    %v1664 = vmul.f32 %v1641, %v1660
    %v1665 = vmul.f32 %v1643, %v1661
    %v1666 = vmul.f32 %v1645, %v1662
    %v1667 = vmul.f32 %v1647, %v1663
    %v1668 = vpack.c.bf16 %v1665, %v1664
    %v1669 = vpack.c.bf16 %v1667, %v1666
    %1670 = vrot.lane.b32.xlu0 %v792, 40
    %v1671 = vpop.permute.xlu0 %1670
    %v1674 = vsel %vm895, %v1668, 0
    %1676 = vmatprep.subr.bf16.mxu0 0
    %1677 = vmatpush1.bf16.msra.mxu0 0
    %1678 = vmatprep.subr.bf16.mxu0 0
    %1679 = vmatpush1.bf16.msra.mxu0 0
    %1680 = vmatprep.subr.bf16.mxu0 0
    %1681 = vmatpush1.bf16.msra.mxu0 0
    %1682 = vmatprep.subr.bf16.mxu0 0
    %1683 = vmatpush1.bf16.msra.mxu0 0
    %1684 = vmatprep.subr.bf16.mxu0 0
    %1685 = vmatpush1.bf16.msra.mxu0 0
    %1686 = vmatprep.subr.bf16.mxu0 0
    %1687 = vmatpush1.bf16.msra.mxu0 0
    %1688 = vmatprep.subr.bf16.mxu0 0
    %1689 = vmatpush1.bf16.msra.mxu0 0
    %1690 = vmatprep.subr.bf16.mxu0 0
    %1691 = vmatpush1.bf16.msra.mxu0 %v1671
    %1692 = vmatprep.subr.bf16.mxu0 0
    %1693 = vmatpush2.bf16.msra.mxu0 0
    %1694 = vmatprep.subr.bf16.mxu0 0
    %1695 = vmatpush2.bf16.msra.mxu0 0
    %1696 = vmatprep.subr.bf16.mxu0 0
    %1697 = vmatpush2.bf16.msra.mxu0 0
    %1698 = vmatprep.subr.bf16.mxu0 0
    %1699 = vmatpush2.bf16.msra.mxu0 0
    %1700 = vmatprep.subr.bf16.mxu0 0
    %1701 = vmatpush2.bf16.msra.mxu0 0
    %1702 = vmatprep.subr.bf16.mxu0 0
    %1703 = vmatpush2.bf16.msra.mxu0 0
    %1704 = vmatprep.subr.bf16.mxu0 0
    %1705 = vmatpush2.bf16.msra.mxu0 0
    %1706 = vmatprep.subr.bf16.mxu0 0
    %1707 = vmatpush2.bf16.msra.mxu0 0
    %1708 = vmatprep.mubr.bf16.mxu0 0
    %1709 = vmatmul.mubr.bf16.gmra.mxu0 %v1674
    %v1710 = vpop.f32.mrf.mxu0
    %v1711 = vadd.f32 0.0, %v1710
    %v1712 = vpop.f32.mrf.mxu0
    %v1713 = vpop.f32.mrf.mxu0
    %v1714 = vadd.f32 0.0, %v1713
    %v1715 = vpop.f32.mrf.mxu0
    %1716 = vdwg.mxu0
    %1717 = vrot.lane.b32.xlu0 %v793, 40
    %v1718 = vpop.permute.xlu0 %1717
    %v1721 = vsel %vm895, %v1669, 0
    %1723 = vmatprep.subr.bf16.mxu0 0
    %1724 = vmatpush1.bf16.msra.mxu0 0
    %1725 = vmatprep.subr.bf16.mxu0 0
    %1726 = vmatpush1.bf16.msra.mxu0 0
    %1727 = vmatprep.subr.bf16.mxu0 0
    %1728 = vmatpush1.bf16.msra.mxu0 0
    %1729 = vmatprep.subr.bf16.mxu0 0
    %1730 = vmatpush1.bf16.msra.mxu0 0
    %1731 = vmatprep.subr.bf16.mxu0 0
    %1732 = vmatpush1.bf16.msra.mxu0 0
    %1733 = vmatprep.subr.bf16.mxu0 0
    %1734 = vmatpush1.bf16.msra.mxu0 0
    %1735 = vmatprep.subr.bf16.mxu0 0
    %1736 = vmatpush1.bf16.msra.mxu0 0
    %1737 = vmatprep.subr.bf16.mxu0 0
    %1738 = vmatpush1.bf16.msra.mxu0 %v1718
    %1739 = vmatprep.subr.bf16.mxu0 0
    %1740 = vmatpush2.bf16.msra.mxu0 0
    %1741 = vmatprep.subr.bf16.mxu0 0
    %1742 = vmatpush2.bf16.msra.mxu0 0
    %1743 = vmatprep.subr.bf16.mxu0 0
    %1744 = vmatpush2.bf16.msra.mxu0 0
    %1745 = vmatprep.subr.bf16.mxu0 0
    %1746 = vmatpush2.bf16.msra.mxu0 0
    %1747 = vmatprep.subr.bf16.mxu0 0
    %1748 = vmatpush2.bf16.msra.mxu0 0
    %1749 = vmatprep.subr.bf16.mxu0 0
    %1750 = vmatpush2.bf16.msra.mxu0 0
    %1751 = vmatprep.subr.bf16.mxu0 0
    %1752 = vmatpush2.bf16.msra.mxu0 0
    %1753 = vmatprep.subr.bf16.mxu0 0
    %1754 = vmatpush2.bf16.msra.mxu0 0
    %1755 = vmatprep.mubr.bf16.mxu0 0
    %1756 = vmatmul.mubr.bf16.gmra.mxu0 %v1721
    %v1757 = vpop.f32.mrf.mxu0
    %v1758 = vadd.f32 0.0, %v1757
    %v1759 = vpop.f32.mrf.mxu0
    %v1760 = vpop.f32.mrf.mxu0
    %v1761 = vadd.f32 0.0, %v1760
    %v1762 = vpop.f32.mrf.mxu0
    %1763 = vdwg.mxu0
    %1768 = vrot.lane.b32.xlu0 %v1227, 8
    %v1769 = vpop.permute.xlu0 %1768
    %1770 = vrot.lane.b32.xlu0 %v1230, 8
    %v1771 = vpop.permute.xlu0 %1770
    %1772 = vrot.lane.b32.xlu0 %v1274, 8
    %v1773 = vpop.permute.xlu0 %1772
    %1774 = vrot.lane.b32.xlu0 %v1277, 8
    %v1775 = vpop.permute.xlu0 %1774
    %1784 = vrot.lane.b32.xlu0 %v1469, 16
    %v1785 = vpop.permute.xlu0 %1784
    %1786 = vrot.lane.b32.xlu0 %v1472, 16
    %v1787 = vpop.permute.xlu0 %1786
    %1788 = vrot.lane.b32.xlu0 %v1516, 16
    %v1789 = vpop.permute.xlu0 %1788
    %1790 = vrot.lane.b32.xlu0 %v1519, 16
    %v1791 = vpop.permute.xlu0 %1790
    %1800 = vrot.lane.b32.xlu0 %v1711, 24
    %v1801 = vpop.permute.xlu0 %1800
    %1802 = vrot.lane.b32.xlu0 %v1714, 24
    %v1803 = vpop.permute.xlu0 %1802
    %1804 = vrot.lane.b32.xlu0 %v1758, 24
    %v1805 = vpop.permute.xlu0 %1804
    %1806 = vrot.lane.b32.xlu0 %v1761, 24
    %v1807 = vpop.permute.xlu0 %1806
    %v1812 = vsel %vm797, %v983, %v1769
    %v1813 = vsel %vm797, %v986, %v1771
    %v1814 = vsel %vm797, %v1030, %v1773
    %v1815 = vsel %vm797, %v1033, %v1775
    %v1816 = vsel %vm895, %v1812, %v1785
    %v1817 = vsel %vm895, %v1813, %v1787
    %v1818 = vsel %vm895, %v1814, %v1789
    %v1819 = vsel %vm895, %v1815, %v1791
    %vm1820 = vcmask 195584
    %v1821 = vsel %vm1820, %v1816, %v1801
    %v1822 = vsel %vm1820, %v1817, %v1803
    %v1823 = vsel %vm1820, %v1818, %v1805
    %v1824 = vsel %vm1820, %v1819, %v1807
    %v1825 = vpack.c.bf16 %v1822, %v1821
    %v1826 = vpack.c.bf16 %v1824, %v1823
    %v1827 = vld [vmem:[%s5] sm:$0xff]
    %v1828 = vld [vmem:[%s5 + $0x8] sm:$0xff]
    %v1829 = vld [vmem:[%s5 + $0x10] sm:$0xff]
    %v1830 = vld [vmem:[%s5 + $0x18] sm:$0xff]
    %v1831 = vpack.c.bf16 %v1828, %v1827
    %v1832 = vpack.c.bf16 %v1830, %v1829
    %v1833 = vld [vmem:[%s6] sm:$0x1]
    %v1835 = vlaneseq
    %v1836 = vshrl.u32 %v1835, 7
    %v1837 = vsub.s32 0, %v1836
    %v1838 = vrot.slane %v1833, %v1837
    %v1841 = vsel %vm165, %v1825, 0
    %v1844 = vsel %vm165, %v1826, 0
    %1846 = vmatprep.subr.bf16.mxu0 0
    %1847 = vmatpush1.bf16.msra.mxu0 0
    %1848 = vmatprep.subr.bf16.mxu0 0
    %1849 = vmatpush1.bf16.msra.mxu0 0
    %1850 = vmatprep.subr.bf16.mxu0 0
    %1851 = vmatpush1.bf16.msra.mxu0 0
    %1852 = vmatprep.subr.bf16.mxu0 0
    %1853 = vmatpush1.bf16.msra.mxu0 0
    %1854 = vmatprep.subr.bf16.mxu0 0
    %1855 = vmatpush1.bf16.msra.mxu0 0
    %1856 = vmatprep.subr.bf16.mxu0 0
    %1857 = vmatpush1.bf16.msra.mxu0 0
    %1858 = vmatprep.subr.bf16.mxu0 0
    %1859 = vmatpush1.bf16.msra.mxu0 %v1832
    %1860 = vmatprep.subr.bf16.mxu0 0
    %1861 = vmatpush1.bf16.msra.mxu0 %v1831
    %1862 = vmatprep.subr.bf16.mxu0 0
    %1863 = vmatpush2.bf16.msra.mxu0 0
    %1864 = vmatprep.subr.bf16.mxu0 0
    %1865 = vmatpush2.bf16.msra.mxu0 0
    %1866 = vmatprep.subr.bf16.mxu0 0
    %1867 = vmatpush2.bf16.msra.mxu0 0
    %1868 = vmatprep.subr.bf16.mxu0 0
    %1869 = vmatpush2.bf16.msra.mxu0 0
    %1870 = vmatprep.subr.bf16.mxu0 0
    %1871 = vmatpush2.bf16.msra.mxu0 0
    %1872 = vmatprep.subr.bf16.mxu0 0
    %1873 = vmatpush2.bf16.msra.mxu0 0
    %1874 = vmatprep.subr.bf16.mxu0 0
    %1875 = vmatpush2.bf16.msra.mxu0 0
    %1876 = vmatprep.subr.bf16.mxu0 0
    %1877 = vmatpush2.bf16.msra.mxu0 0
    %1878 = vmatprep.mubr.bf16.mxu0 0
    %1879 = vmatmul.mubr.bf16.gmra.mxu0 %v1841
    %v1880 = vpop.f32.mrf.mxu0
    %v1881 = vadd.f32 %v1838, %v1880
    %v1882 = vpop.f32.mrf.mxu0
    %v1883 = vpop.f32.mrf.mxu0
    %v1884 = vadd.f32 %v1838, %v1883
    %v1885 = vpop.f32.mrf.mxu0
    %1886 = vmatprep.mubr.bf16.mxu0 0
    %1887 = vmatmul.mubr.bf16.gmra.mxu0 %v1844
    %v1888 = vpop.f32.mrf.mxu0
    %v1889 = vadd.f32 %v1838, %v1888
    %v1890 = vpop.f32.mrf.mxu0
    %v1891 = vpop.f32.mrf.mxu0
    %v1892 = vadd.f32 %v1838, %v1891
    %v1893 = vpop.f32.mrf.mxu0
    %1894 = vdwg.mxu0
    %v1895 = vadd.f32 %v1881, %v712
    %v1896 = vadd.f32 %v1884, %v713
    %v1897 = vadd.f32 %v1889, %v714
    %v1898 = vadd.f32 %v1892, %v715
    %v1899 = vld [vmem:[%s7] sm:$0x1]
    %v1900 = vld [vmem:[%s8] sm:$0x1]
    %v1901 = vsel %vm165, %v1895, 0.0
    %1902 = vadd.xlane.f32.xlu0 %v1901
    %v1903 = vpop.xlane.xlu0 %1902
    %v1904 = vsel %vm165, %v1896, 0.0
    %1905 = vadd.xlane.f32.xlu0 %v1904
    %v1906 = vpop.xlane.xlu0 %1905
    %v1907 = vsel %vm165, %v1897, 0.0
    %1908 = vadd.xlane.f32.xlu0 %v1907
    %v1909 = vpop.xlane.xlu0 %1908
    %v1910 = vsel %vm165, %v1898, 0.0
    %1911 = vadd.xlane.f32.xlu0 %v1910
    %v1912 = vpop.xlane.xlu0 %1911
    %v1913 = vrcp.pop 32.0
    %v1914 = vmul.f32 %v1903, %v1913
    %v1915 = vmul.f32 %v1906, %v1913
    %v1916 = vmul.f32 %v1909, %v1913
    %v1917 = vmul.f32 %v1912, %v1913
    %v1918 = vsub.f32 %v1895, %v1914
    %v1919 = vsub.f32 %v1896, %v1915
    %v1920 = vsub.f32 %v1897, %v1916
    %v1921 = vsub.f32 %v1898, %v1917
    %v1922 = vmul.f32 %v1918, %v1918
    %v1923 = vmul.f32 %v1919, %v1919
    %v1924 = vmul.f32 %v1920, %v1920
    %v1925 = vmul.f32 %v1921, %v1921
    %v1926 = vsel %vm165, %v1922, 0.0
    %1927 = vadd.xlane.f32.xlu0 %v1926
    %v1928 = vpop.xlane.xlu0 %1927
    %v1929 = vsel %vm165, %v1923, 0.0
    %1930 = vadd.xlane.f32.xlu0 %v1929
    %v1931 = vpop.xlane.xlu0 %1930
    %v1932 = vsel %vm165, %v1924, 0.0
    %1933 = vadd.xlane.f32.xlu0 %v1932
    %v1934 = vpop.xlane.xlu0 %1933
    %v1935 = vsel %vm165, %v1925, 0.0
    %1936 = vadd.xlane.f32.xlu0 %v1935
    %v1937 = vpop.xlane.xlu0 %1936
    %v1938 = vmul.f32 %v1928, %v1913
    %v1939 = vmul.f32 %v1931, %v1913
    %v1940 = vmul.f32 %v1934, %v1913
    %v1941 = vmul.f32 %v1937, %v1913
    %v1942 = vadd.f32 %v1938, 1e-05
    %v1943 = vadd.f32 %v1939, 1e-05
    %v1944 = vadd.f32 %v1940, 1e-05
    %v1945 = vadd.f32 %v1941, 1e-05
    %v1946 = vrsqrt.pop %v1942
    %v1947 = vrsqrt.pop %v1943
    %v1948 = vrsqrt.pop %v1944
    %v1949 = vrsqrt.pop %v1945
    %v1950 = vmul.f32 %v1918, %v1946
    %v1951 = vmul.f32 %v1919, %v1947
    %v1952 = vmul.f32 %v1920, %v1948
    %v1953 = vmul.f32 %v1921, %v1949
    %v1955 = vlaneseq
    %v1956 = vshrl.u32 %v1955, 7
    %v1957 = vsub.s32 0, %v1956
    %v1958 = vrot.slane %v1899, %v1957
    %v1960 = vmul.f32 %v1950, %v1958
    %v1961 = vmul.f32 %v1951, %v1958
    %v1962 = vmul.f32 %v1952, %v1958
    %v1963 = vmul.f32 %v1953, %v1958
    %v1965 = vlaneseq
    %v1966 = vshrl.u32 %v1965, 7
    %v1967 = vsub.s32 0, %v1966
    %v1968 = vrot.slane %v1900, %v1967
    %v1970 = vadd.f32 %v1960, %v1968
    %v1971 = vadd.f32 %v1961, %v1968
    %v1972 = vadd.f32 %v1962, %v1968
    %v1973 = vadd.f32 %v1963, %v1968
    %v1974 = vpack.c.bf16 %v1971, %v1970
    %v1975 = vpack.c.bf16 %v1973, %v1972
    %v1976 = vld [vmem:[%s9] sm:$0xff]
    %v1977 = vld [vmem:[%s9 + $0x8] sm:$0xff]
    %v1978 = vld [vmem:[%s9 + $0x10] sm:$0xff]
    %v1979 = vld [vmem:[%s9 + $0x18] sm:$0xff]
    %v1980 = vpack.c.bf16 %v1977, %v1976
    %v1981 = vpack.c.bf16 %v1979, %v1978
    %v1982 = vld [vmem:[%s10] sm:$0x1]
    %v1984 = vlaneseq
    %v1985 = vshrl.u32 %v1984, 7
    %v1986 = vsub.s32 0, %v1985
    %v1987 = vrot.slane %v1982, %v1986
    %v1990 = vsel %vm165, %v1974, 0
    %v1993 = vsel %vm165, %v1975, 0
    %1995 = vmatprep.subr.bf16.mxu0 0
    %1996 = vmatpush1.bf16.msra.mxu0 0
    %1997 = vmatprep.subr.bf16.mxu0 0
    %1998 = vmatpush1.bf16.msra.mxu0 0
    %1999 = vmatprep.subr.bf16.mxu0 0
    %2000 = vmatpush1.bf16.msra.mxu0 0
    %2001 = vmatprep.subr.bf16.mxu0 0
    %2002 = vmatpush1.bf16.msra.mxu0 0
    %2003 = vmatprep.subr.bf16.mxu0 0
    %2004 = vmatpush1.bf16.msra.mxu0 0
    %2005 = vmatprep.subr.bf16.mxu0 0
    %2006 = vmatpush1.bf16.msra.mxu0 0
    %2007 = vmatprep.subr.bf16.mxu0 0
    %2008 = vmatpush1.bf16.msra.mxu0 %v1981
    %2009 = vmatprep.subr.bf16.mxu0 0
    %2010 = vmatpush1.bf16.msra.mxu0 %v1980
    %2011 = vmatprep.subr.bf16.mxu0 0
    %2012 = vmatpush2.bf16.msra.mxu0 0
    %2013 = vmatprep.subr.bf16.mxu0 0
    %2014 = vmatpush2.bf16.msra.mxu0 0
    %2015 = vmatprep.subr.bf16.mxu0 0
    %2016 = vmatpush2.bf16.msra.mxu0 0
    %2017 = vmatprep.subr.bf16.mxu0 0
    %2018 = vmatpush2.bf16.msra.mxu0 0
    %2019 = vmatprep.subr.bf16.mxu0 0
    %2020 = vmatpush2.bf16.msra.mxu0 0
    %2021 = vmatprep.subr.bf16.mxu0 0
    %2022 = vmatpush2.bf16.msra.mxu0 0
    %2023 = vmatprep.subr.bf16.mxu0 0
    %2024 = vmatpush2.bf16.msra.mxu0 0
    %2025 = vmatprep.subr.bf16.mxu0 0
    %2026 = vmatpush2.bf16.msra.mxu0 0
    %2027 = vmatprep.mubr.bf16.mxu0 0
    %2028 = vmatmul.mubr.bf16.gmra.mxu0 %v1990
    %v2029 = vpop.f32.mrf.mxu0
    %v2030 = vadd.f32 %v1987, %v2029
    %v2031 = vpop.f32.mrf.mxu0
    %v2032 = vpop.f32.mrf.mxu0
    %v2033 = vadd.f32 %v1987, %v2032
    %v2034 = vpop.f32.mrf.mxu0
    %2035 = vmatprep.mubr.bf16.mxu0 0
    %2036 = vmatmul.mubr.bf16.gmra.mxu0 %v1993
    %v2037 = vpop.f32.mrf.mxu0
    %v2038 = vadd.f32 %v1987, %v2037
    %v2039 = vpop.f32.mrf.mxu0
    %v2040 = vpop.f32.mrf.mxu0
    %v2041 = vadd.f32 %v1987, %v2040
    %v2042 = vpop.f32.mrf.mxu0
    %2043 = vdwg.mxu0
    %v2044 = vmax.f32 %v2030, 0.0
    %v2045 = vmax.f32 %v2033, 0.0
    %v2046 = vmax.f32 %v2038, 0.0
    %v2047 = vmax.f32 %v2041, 0.0
    %v2048 = vpack.c.bf16 %v2045, %v2044
    %v2049 = vpack.c.bf16 %v2047, %v2046
    %v2050 = vld [vmem:[%s11] sm:$0xff]
    %v2051 = vld [vmem:[%s11 + $0x8] sm:$0xff]
    %v2052 = vld [vmem:[%s11 + $0x10] sm:$0xff]
    %v2053 = vld [vmem:[%s11 + $0x18] sm:$0xff]
    %v2054 = vld [vmem:[%s11 + $0x20] sm:$0xff]
    %v2055 = vld [vmem:[%s11 + $0x28] sm:$0xff]
    %v2056 = vld [vmem:[%s11 + $0x30] sm:$0xff]
    %v2057 = vld [vmem:[%s11 + $0x38] sm:$0xff]
    %v2058 = vpack.c.bf16 %v2051, %v2050
    %v2059 = vpack.c.bf16 %v2053, %v2052
    %v2060 = vpack.c.bf16 %v2055, %v2054
    %v2061 = vpack.c.bf16 %v2057, %v2056
    %v2062 = vld [vmem:[%s12] sm:$0x1]
    %v2064 = vlaneseq
    %v2065 = vshrl.u32 %v2064, 7
    %v2066 = vsub.s32 0, %v2065
    %v2067 = vrot.slane %v2062, %v2066
    %v2070 = vsel %vm170, %v2048, 0
    %v2073 = vsel %vm170, %v2049, 0
    %2075 = vmatprep.subr.bf16.mxu0 0
    %2076 = vmatpush1.bf16.msra.mxu0 0
    %2077 = vmatprep.subr.bf16.mxu0 0
    %2078 = vmatpush1.bf16.msra.mxu0 0
    %2079 = vmatprep.subr.bf16.mxu0 0
    %2080 = vmatpush1.bf16.msra.mxu0 0
    %2081 = vmatprep.subr.bf16.mxu0 0
    %2082 = vmatpush1.bf16.msra.mxu0 0
    %2083 = vmatprep.subr.bf16.mxu0 0
    %2084 = vmatpush1.bf16.msra.mxu0 %v2061
    %2085 = vmatprep.subr.bf16.mxu0 0
    %2086 = vmatpush1.bf16.msra.mxu0 %v2060
    %2087 = vmatprep.subr.bf16.mxu0 0
    %2088 = vmatpush1.bf16.msra.mxu0 %v2059
    %2089 = vmatprep.subr.bf16.mxu0 0
    %2090 = vmatpush1.bf16.msra.mxu0 %v2058
    %2091 = vmatprep.subr.bf16.mxu0 0
    %2092 = vmatpush2.bf16.msra.mxu0 0
    %2093 = vmatprep.subr.bf16.mxu0 0
    %2094 = vmatpush2.bf16.msra.mxu0 0
    %2095 = vmatprep.subr.bf16.mxu0 0
    %2096 = vmatpush2.bf16.msra.mxu0 0
    %2097 = vmatprep.subr.bf16.mxu0 0
    %2098 = vmatpush2.bf16.msra.mxu0 0
    %2099 = vmatprep.subr.bf16.mxu0 0
    %2100 = vmatpush2.bf16.msra.mxu0 0
    %2101 = vmatprep.subr.bf16.mxu0 0
    %2102 = vmatpush2.bf16.msra.mxu0 0
    %2103 = vmatprep.subr.bf16.mxu0 0
    %2104 = vmatpush2.bf16.msra.mxu0 0
    %2105 = vmatprep.subr.bf16.mxu0 0
    %2106 = vmatpush2.bf16.msra.mxu0 0
    %2107 = vmatprep.mubr.bf16.mxu0 0
    %2108 = vmatmul.mubr.bf16.gmra.mxu0 %v2070
    %v2109 = vpop.f32.mrf.mxu0
    %v2110 = vadd.f32 %v2067, %v2109
    %v2111 = vpop.f32.mrf.mxu0
    %v2112 = vpop.f32.mrf.mxu0
    %v2113 = vadd.f32 %v2067, %v2112
    %v2114 = vpop.f32.mrf.mxu0
    %2115 = vmatprep.mubr.bf16.mxu0 0
    %2116 = vmatmul.mubr.bf16.gmra.mxu0 %v2073
    %v2117 = vpop.f32.mrf.mxu0
    %v2118 = vadd.f32 %v2067, %v2117
    %v2119 = vpop.f32.mrf.mxu0
    %v2120 = vpop.f32.mrf.mxu0
    %v2121 = vadd.f32 %v2067, %v2120
    %v2122 = vpop.f32.mrf.mxu0
    %2123 = vdwg.mxu0
    %v2124 = vadd.f32 %v2110, %v1970
    %v2125 = vadd.f32 %v2113, %v1971
    %v2126 = vadd.f32 %v2118, %v1972
    %v2127 = vadd.f32 %v2121, %v1973
    %v2128 = vld [vmem:[%s13] sm:$0x1]
    %v2129 = vld [vmem:[%s14] sm:$0x1]
    %v2130 = vsel %vm165, %v2124, 0.0
    %2131 = vadd.xlane.f32.xlu0 %v2130
    %v2132 = vpop.xlane.xlu0 %2131
    %v2133 = vsel %vm165, %v2125, 0.0
    %2134 = vadd.xlane.f32.xlu0 %v2133
    %v2135 = vpop.xlane.xlu0 %2134
    %v2136 = vsel %vm165, %v2126, 0.0
    %2137 = vadd.xlane.f32.xlu0 %v2136
    %v2138 = vpop.xlane.xlu0 %2137
    %v2139 = vsel %vm165, %v2127, 0.0
    %2140 = vadd.xlane.f32.xlu0 %v2139
    %v2141 = vpop.xlane.xlu0 %2140
    %v2142 = vmul.f32 %v2132, %v1913
    %v2143 = vmul.f32 %v2135, %v1913
    %v2144 = vmul.f32 %v2138, %v1913
    %v2145 = vmul.f32 %v2141, %v1913
    %v2146 = vsub.f32 %v2124, %v2142
    %v2147 = vsub.f32 %v2125, %v2143
    %v2148 = vsub.f32 %v2126, %v2144
    %v2149 = vsub.f32 %v2127, %v2145
    %v2150 = vmul.f32 %v2146, %v2146
    %v2151 = vmul.f32 %v2147, %v2147
    %v2152 = vmul.f32 %v2148, %v2148
    %v2153 = vmul.f32 %v2149, %v2149
    %v2154 = vsel %vm165, %v2150, 0.0
    %2155 = vadd.xlane.f32.xlu0 %v2154
    %v2156 = vpop.xlane.xlu0 %2155
    %v2157 = vsel %vm165, %v2151, 0.0
    %2158 = vadd.xlane.f32.xlu0 %v2157
    %v2159 = vpop.xlane.xlu0 %2158
    %v2160 = vsel %vm165, %v2152, 0.0
    %2161 = vadd.xlane.f32.xlu0 %v2160
    %v2162 = vpop.xlane.xlu0 %2161
    %v2163 = vsel %vm165, %v2153, 0.0
    %2164 = vadd.xlane.f32.xlu0 %v2163
    %v2165 = vpop.xlane.xlu0 %2164
    %v2166 = vmul.f32 %v2156, %v1913
    %v2167 = vmul.f32 %v2159, %v1913
    %v2168 = vmul.f32 %v2162, %v1913
    %v2169 = vmul.f32 %v2165, %v1913
    %v2170 = vadd.f32 %v2166, 1e-05
    %v2171 = vadd.f32 %v2167, 1e-05
    %v2172 = vadd.f32 %v2168, 1e-05
    %v2173 = vadd.f32 %v2169, 1e-05
    %v2174 = vrsqrt.pop %v2170
    %v2175 = vrsqrt.pop %v2171
    %v2176 = vrsqrt.pop %v2172
    %v2177 = vrsqrt.pop %v2173
    %v2178 = vmul.f32 %v2146, %v2174
    %v2179 = vmul.f32 %v2147, %v2175
    %v2180 = vmul.f32 %v2148, %v2176
    %v2181 = vmul.f32 %v2149, %v2177
    %v2183 = vlaneseq
    %v2184 = vshrl.u32 %v2183, 7
    %v2185 = vsub.s32 0, %v2184
    %v2186 = vrot.slane %v2128, %v2185
    %v2188 = vmul.f32 %v2178, %v2186
    %v2189 = vmul.f32 %v2179, %v2186
    %v2190 = vmul.f32 %v2180, %v2186
    %v2191 = vmul.f32 %v2181, %v2186
    %v2193 = vlaneseq
    %v2194 = vshrl.u32 %v2193, 7
    %v2195 = vsub.s32 0, %v2194
    %v2196 = vrot.slane %v2129, %v2195
    %v2198 = vadd.f32 %v2188, %v2196
    %v2199 = vadd.f32 %v2189, %v2196
    %v2200 = vadd.f32 %v2190, %v2196
    %v2201 = vadd.f32 %v2191, %v2196
    %2202 = vst.msk [vmem:[#allocation2] sm:$0xff] %vm165, %v2198
    %2203 = vst.msk [vmem:[#allocation2 + $0x8] sm:$0xff] %vm165, %v2199
    %2204 = vst.msk [vmem:[#allocation2 + $0x10] sm:$0xff] %vm165, %v2200
    %2205 = vst.msk [vmem:[#allocation2 + $0x18] sm:$0xff] %vm165, %v2201
    // Predicated region
    $region62: #{tpu_custom_call.1} parent=1 // pred_check
      _
    $region63: #{tpu_custom_call.1} parent=1 // pred_check_branch
      %2207 = sbr.rel (0) target = $region65
    $region64: #{tpu_custom_call.1} parent=1 // pred_region
      %s2209 = ssub.s32 512, 512
      %2210 = vsyncadd [#allocation3], %s2209
      %s2211 = sshll.u32 [#allocation2], 4
      %s2212 = int_to_ptr.vmem [resolvable:$true] %s2211
      %2217 = dma.vmem_to_hbm [thread:$0]  %s2212, 512, %s15, [#allocation3], 128, 128, 8
    $region65: #{tpu_custom_call.1} parent=1 // pred_fallthru
      _
    // Predicated region
    $region66: #{tpu_custom_call.1} parent=1 // pred_check
      _
    $region67: #{tpu_custom_call.1} parent=1 // pred_check_branch
      %2219 = sbr.rel (0) target = $region69
    $region68: #{tpu_custom_call.1} parent=1 // pred_region
      %2220 = dma.done [#allocation3], 512
    $region69: #{tpu_custom_call.1} parent=1 // pred_fallthru
      _
    %2221 = vsyncpa [#allocation3], 1

</llo_original>
